<compile_context>
chip_gen: v7x
topology: tpu7x:2x2x1
jax: 0.10.0
libtpu: 0.0.40
codegen_flags: <defaults>
</compile_context>

<pallas_src>
import numpy as np
import jax
import jax.numpy as jnp
from jax import lax
from jax.experimental import pallas as pl
from jax.experimental.pallas import tpu as pltpu

H = W = 24            # input spatial size
CIN = 3               # input channels
C1 = 8                # conv1 output channels
C2 = 32               # conv2 output channels
KH = KW = 2           # conv1 kernel
OH = OW = 17          # final output spatial size
TAPS = KH * KW * CIN  # 12 composed taps

# ---------------------------------------------------------------------------
# Static (data/weight independent) selection matrices, built once with numpy.
# Output pixel (oh, ow), tap (kh, kw, cin) reads x[cin, 2*oh+kh-5, 2*ow+kw-5]
# (the -5 folds conv1 pad=4 with conv2 pad=1 / stride=2).  Out-of-range
# indices are zero padding -> all-zero selection rows/cols.
# ---------------------------------------------------------------------------
_CCAT = np.zeros((W, KW * OW), np.float32)        # column selection, lanes=(kw,ow)
for _kw in range(KW):
    for _ow in range(OW):
        _c = 2 * _ow + _kw - 5
        if 0 <= _c < W:
            _CCAT[_c, _kw * OW + _ow] = 1.0

_RSEL = np.zeros((KH, OH, H), np.float32)         # row selection per kh
for _kh in range(KH):
    for _oh in range(OH):
        _r = 2 * _oh + _kh - 5
        if 0 <= _r < H:
            _RSEL[_kh, _oh, _r] = 1.0

_o = np.arange(OH)
_BORDER = ((_o[:, None] == 0) | (_o[:, None] == OH - 1) |
           (_o[None, :] == 0) | (_o[None, :] == OW - 1))   # conv2 pad-1 border


def _fused_conv_kernel(xr_ref, ccat_ref, m0_ref, m1_ref, bias_ref, o_ref):
    # xr_ref:   (72, 24)   VMEM  input x reshaped to (cin*r, c)
    # ccat_ref: (24, 34)   VMEM  column selection, lanes = (kw, ow)
    # m0_ref:   (544, 72)  VMEM  fused [row-select + kh/cin sum + w12 mix], kw=0
    # m1_ref:   (544, 72)  VMEM  same for kw=1
    # bias_ref: (544, 17)  VMEM  per-(cout,oh,ow) bias (border vs interior)
    # o_ref:    (544, 17)  VMEM  output, rows = cout*17 + oh, lanes = ow
    f32 = jnp.float32

    # Stage 1: column selection for both conv1 kw taps in ONE MXU matmul.
    #   xc[(cin, r), (kw, ow)] = x[cin, r, 2*ow + kw - 5]   (0 when padded)
    xc = jnp.dot(xr_ref[...], ccat_ref[...], preferred_element_type=f32)   # (72, 34)

    # Stage 2: row selection + kh/cin tap contraction + output-channel mix,
    # all folded into one precomputed matrix per kw -> two MXU matmuls.
    p = jnp.dot(m0_ref[...], xc[:, :OW], preferred_element_type=f32)       # (544, 17)
    p = p + jnp.dot(m1_ref[...], xc[:, OW:], preferred_element_type=f32)   # (544, 17)

    # Vectorized bias add + single dense block store (no per-channel loop).
    o_ref[...] = p + bias_ref[...]


@jax.jit
def model_forward(x1, w1, b1, w2, b2):
    hi = lax.Precision.HIGHEST

    # Fold cat([v1]*5, dim=1) into conv2: sum its 5 input-channel groups.
    w2e = w2.reshape(C2, 5, C1).sum(axis=1)                        # (32, 8)
    # conv1 weight as (kh,kw,cin) x cout1, composed with the 1x1 conv2.
    w1m = jnp.transpose(w1, (2, 3, 1, 0)).reshape(TAPS, C1)        # (12, 8)
    w12 = jnp.dot(w1m, w2e.T, precision=hi)                        # (12, 32)
    bias_inner = jnp.dot(w2e, b1, precision=hi) + b2               # (32,)

    # Fuse row selection, kh-tap sum and channel mix into one
    # (cout*oh) x (cin*r) matrix per kw (weights-only, ~157 KB each).
    w12r = w12.reshape(KH, KW, CIN, C2)                            # [kh, kw, cin, n]
    mbig = jnp.einsum('hwcn,hor->wnocr', w12r, jnp.asarray(_RSEL),
                      precision=hi).reshape(KW, C2 * OH, CIN * H)  # (2, 544, 72)

    # Bias map: b2 on the conv2 zero-pad border, composed bias in the interior.
    bias_map = jnp.where(jnp.asarray(_BORDER)[None, :, :],
                         b2[:, None, None],
                         bias_inner[:, None, None]).reshape(C2 * OH, OW)   # (544, 17)

    xr = x1.reshape(CIN * H, W)                                    # (72, 24), free reshape

    out2d = pl.pallas_call(
        _fused_conv_kernel,
        out_shape=jax.ShapeDtypeStruct((C2 * OH, OW), jnp.float32),
        in_specs=[
            pl.BlockSpec(memory_space=pltpu.MemorySpace.VMEM),   # xr
            pl.BlockSpec(memory_space=pltpu.MemorySpace.VMEM),   # Ccat
            pl.BlockSpec(memory_space=pltpu.MemorySpace.VMEM),   # Mbig kw=0
            pl.BlockSpec(memory_space=pltpu.MemorySpace.VMEM),   # Mbig kw=1
            pl.BlockSpec(memory_space=pltpu.MemorySpace.VMEM),   # bias map
        ],
        out_specs=pl.BlockSpec(memory_space=pltpu.MemorySpace.VMEM),
    )(xr, jnp.asarray(_CCAT), mbig[0], mbig[1], bias_map)

    # (544, 17) -> (1, 32, 17, 17): contiguous, free reshape in the wrapper.
    return out2d.reshape(1, C2, OH, OW)


if __name__ == "__main__":
    key = jax.random.PRNGKey(0)
    k_x, k_w1, k_b1, k_w2, k_b2 = jax.random.split(key, 5)

    x1 = jax.random.normal(k_x, (1, 3, 24, 24), dtype=jnp.float32)

    # conv1 params: weight (8,3,2,2), bias (8,); PyTorch-style uniform init.
    bound1 = 1.0 / (3 * 2 * 2) ** 0.5
    w1 = jax.random.uniform(k_w1, (8, 3, 2, 2), jnp.float32, -bound1, bound1)
    b1 = jax.random.uniform(k_b1, (8,), jnp.float32, -bound1, bound1)

    # conv2 params: instantiated with 40 input channels (see TODO above).
    bound2 = 1.0 / (40 * 1 * 1) ** 0.5
    w2 = jax.random.uniform(k_w2, (32, 40, 1, 1), jnp.float32, -bound2, bound2)
    b2 = jax.random.uniform(k_b2, (32,), jnp.float32, -bound2, bound2)

    out = model_forward(x1, w1, b1, w2, b2)
    jax.block_until_ready(out)
    assert out.shape == (1, 32, 17, 17), out.shape
    assert out.dtype == jnp.float32

    # Reference check against XLA convs (loose tol to allow MXU rounding).
    v1 = lax.conv_general_dilated(
        x1, w1, (1, 1), [(4, 4), (4, 4)],
        dimension_numbers=("NCHW", "OIHW", "NCHW"),
        precision=lax.Precision.HIGHEST) + b1.reshape(1, 8, 1, 1)
    v3 = jnp.concatenate([v1] * 5, axis=1)
    ref = lax.conv_general_dilated(
        v3, w2, (2, 2), [(1, 1), (1, 1)],
        dimension_numbers=("NCHW", "OIHW", "NCHW"),
        precision=lax.Precision.HIGHEST) + b2.reshape(1, 32, 1, 1)
    err = float(jnp.max(jnp.abs(out - ref)))
    assert jnp.allclose(out, ref, atol=2e-2, rtol=2e-2), err

    print("KERNEL_OK")
</pallas_src>

<mosaic_0001>
module attributes {stable_mosaic.version = 11 : i64} {
  func.func @_fused_conv_kernel(%arg0: memref<72x24xf32, #tpu.memory_space<vmem>>, %arg1: memref<24x34xf32, #tpu.memory_space<vmem>>, %arg2: memref<544x72xf32, #tpu.memory_space<vmem>>, %arg3: memref<544x72xf32, #tpu.memory_space<vmem>>, %arg4: memref<544x17xf32, #tpu.memory_space<vmem>>, %arg5: memref<544x17xf32, #tpu.memory_space<vmem>>) attributes {dimension_semantics = [], scalar_prefetch = 0 : i64, scratch_operands = 0 : i64, tpu.core_type = #tpu.core_type<tc>} {
    %c0 = arith.constant 0 : index
    %c0_0 = arith.constant 0 : index
    %0 = vector.load %arg0[%c0, %c0_0] : memref<72x24xf32, #tpu.memory_space<vmem>>, vector<72x24xf32>
    %c0_1 = arith.constant 0 : index
    %c0_2 = arith.constant 0 : index
    %1 = vector.load %arg1[%c0_1, %c0_2] : memref<24x34xf32, #tpu.memory_space<vmem>>, vector<24x34xf32>
    %cst = arith.constant dense<0.000000e+00> : vector<72x34xf32>
    %2 = tpu.matmul %0, %1, %cst {dimension_numbers = #tpu.dot_dimension_numbers<[1], [0], [0], [1], [0, 0, 1, 1], [], []>} : vector<72x24xf32>, vector<24x34xf32>, vector<72x34xf32> -> vector<72x34xf32>
    %c0_3 = arith.constant 0 : index
    %c0_4 = arith.constant 0 : index
    %3 = vector.load %arg2[%c0_3, %c0_4] : memref<544x72xf32, #tpu.memory_space<vmem>>, vector<544x72xf32>
    %4 = vector.extract_strided_slice %2 {offsets = [0, 0], sizes = [72, 17], strides = [1, 1]} : vector<72x34xf32> to vector<72x17xf32>
    %cst_5 = arith.constant dense<0.000000e+00> : vector<544x17xf32>
    %5 = tpu.matmul %3, %4, %cst_5 {dimension_numbers = #tpu.dot_dimension_numbers<[1], [0], [0], [1], [0, 0, 1, 1], [], []>} : vector<544x72xf32>, vector<72x17xf32>, vector<544x17xf32> -> vector<544x17xf32>
    %c0_6 = arith.constant 0 : index
    %c0_7 = arith.constant 0 : index
    %6 = vector.load %arg3[%c0_6, %c0_7] : memref<544x72xf32, #tpu.memory_space<vmem>>, vector<544x72xf32>
    %7 = vector.extract_strided_slice %2 {offsets = [0, 17], sizes = [72, 17], strides = [1, 1]} : vector<72x34xf32> to vector<72x17xf32>
    %cst_8 = arith.constant dense<0.000000e+00> : vector<544x17xf32>
    %8 = tpu.matmul %6, %7, %cst_8 {dimension_numbers = #tpu.dot_dimension_numbers<[1], [0], [0], [1], [0, 0, 1, 1], [], []>} : vector<544x72xf32>, vector<72x17xf32>, vector<544x17xf32> -> vector<544x17xf32>
    %9 = arith.addf %5, %8 : vector<544x17xf32>
    %c0_9 = arith.constant 0 : index
    %c0_10 = arith.constant 0 : index
    %10 = vector.load %arg4[%c0_9, %c0_10] : memref<544x17xf32, #tpu.memory_space<vmem>>, vector<544x17xf32>
    %11 = arith.addf %9, %10 : vector<544x17xf32>
    %c0_11 = arith.constant 0 : index
    %c0_12 = arith.constant 0 : index
    %12 = vector.load %arg5[%c0_11, %c0_12] : memref<544x17xf32, #tpu.memory_space<vmem>>, vector<544x17xf32>
    tpu.vector_store %arg5[%c0_11, %c0_12], %11 {strides = array<i32>} : memref<544x17xf32, #tpu.memory_space<vmem>>, vector<544x17xf32>,
    return
  }
}

</mosaic_0001>

<llo_original>
// kernel: model_forward.1
$region0: #{model_forward.1}
  #allocation0 [shape = 'u32[]', space=smem, size = 0x4, offset = 0x4, fixed_abs, tag = 'smem constant byte address 0x4 - core index']
  #allocation1 [shape = 'u32[144,128]{1,0:T(1,128)}', space=vmem, size = 0x12000, scoped, tag = 'internal scratch']
  %s0 = inlined_call_operand.vmem [shape: f32[72,24], index: 0, kind: input, shape index: {}]
  %s1 = inlined_call_operand.vmem [shape: f32[24,34], index: 1, kind: input, shape index: {}]
  %s2 = inlined_call_operand.vmem [shape: f32[544,72], index: 2, kind: input, shape index: {}]
  %s3 = inlined_call_operand.vmem [shape: f32[544,72], index: 3, kind: input, shape index: {}]
  %s4 = inlined_call_operand.vmem [shape: f32[544,17], index: 4, kind: input, shape index: {}]
  %s5 = inlined_call_operand.vmem [shape: f32[544,17], index: 5, kind: output, shape index: {}]
  %s6 = sld [smem:[#allocation0]]
  $region30: #{model_forward.1} parent=0
    _
  %s8 = ssub.s32 1, %s6
  %s9 = scalar_select 0, %s8, %s6
  // Predicated region
  $region2: #{model_forward.1} parent=0 // pred_check
    _
  $region3: #{model_forward.1} parent=0 // pred_check_branch
    %11 = sbr.rel (0) target = $region5
  $region4: #{model_forward.1} parent=0 // pred_region
    _
  $region5: #{model_forward.1} parent=0 // pred_fallthru
    _
  // Predicated region
  $region6: #{model_forward.1} parent=0 // pred_check
    _
  $region7: #{model_forward.1} parent=0 // pred_check_branch
    %13 = sbr.rel (0) target = $region9
  $region8: #{model_forward.1} parent=0 // pred_region
    _
  $region9: #{model_forward.1} parent=0 // pred_fallthru
    _
  // Predicated region
  $region10: #{model_forward.1} parent=0 // pred_check
    _
  $region11: #{model_forward.1} parent=0 // pred_check_branch
    %15 = sbr.rel (0) target = $region13
  $region12: #{model_forward.1} parent=0 // pred_region
    _
  $region13: #{model_forward.1} parent=0 // pred_fallthru
    _
  // Predicated region
  $region14: #{model_forward.1} parent=0 // pred_check
    _
  $region15: #{model_forward.1} parent=0 // pred_check_branch
    %17 = sbr.rel (0) target = $region17
  $region16: #{model_forward.1} parent=0 // pred_region
    _
  $region17: #{model_forward.1} parent=0 // pred_fallthru
    _
  // Predicated region
  $region18: #{model_forward.1} parent=0 // pred_check
    _
  $region19: #{model_forward.1} parent=0 // pred_check_branch
    %19 = sbr.rel (0) target = $region21
  $region20: #{model_forward.1} parent=0 // pred_region
    _
  $region21: #{model_forward.1} parent=0 // pred_fallthru
    _
  %v20 = vld [vmem:[%s0] sm:$0xff]
  %v21 = vld [vmem:[%s0 + $0x8] sm:$0xff]
  %v22 = vld [vmem:[%s0 + $0x10] sm:$0xff]
  %v23 = vld [vmem:[%s0 + $0x18] sm:$0xff]
  %v24 = vld [vmem:[%s0 + $0x20] sm:$0xff]
  %v25 = vld [vmem:[%s0 + $0x28] sm:$0xff]
  %v26 = vld [vmem:[%s0 + $0x30] sm:$0xff]
  %v27 = vld [vmem:[%s0 + $0x38] sm:$0xff]
  %v28 = vld [vmem:[%s0 + $0x40] sm:$0xff]
  %v29 = vld [vmem:[%s1] sm:$0xff]
  %v30 = vld [vmem:[%s1 + $0x8] sm:$0xff]
  %v31 = vld [vmem:[%s1 + $0x10] sm:$0xff]
  %vm32 = vcmask 195584
  %v34 = vsel %vm32, %v20, 0
  %v37 = vsel %vm32, %v21, 0
  %v40 = vsel %vm32, %v22, 0
  %v43 = vsel %vm32, %v23, 0
  %v46 = vsel %vm32, %v24, 0
  %v49 = vsel %vm32, %v25, 0
  %v52 = vsel %vm32, %v26, 0
  %v55 = vsel %vm32, %v27, 0
  %v58 = vsel %vm32, %v28, 0
  %60 = vmatprep.subr.mxu0 0.0
  %61 = vmatpush1.msra.mxu0 %v29
  %62 = vmatprep.subr.mxu0 0.0
  %63 = vmatpush1.msra.mxu0 %v30
  %64 = vmatprep.subr.mxu0 0.0
  %65 = vmatpush1.msra.mxu0 %v31
  %66 = vmatprep.subr.mxu0 0.0
  %67 = vmatpush1.msra.mxu0 0.0
  %68 = vmatprep.subr.mxu0 0.0
  %69 = vmatpush1.msra.mxu0 0.0
  %70 = vmatprep.subr.mxu0 0.0
  %71 = vmatpush1.msra.mxu0 0.0
  %72 = vmatprep.subr.mxu0 0.0
  %73 = vmatpush1.msra.mxu0 0.0
  %74 = vmatprep.subr.mxu0 0.0
  %75 = vmatpush1.msra.mxu0 0.0
  %76 = vmatprep.subr.mxu0 0.0
  %77 = vmatpush1.msra.mxu0 0.0
  %78 = vmatprep.subr.mxu0 0.0
  %79 = vmatpush1.msra.mxu0 0.0
  %80 = vmatprep.subr.mxu0 0.0
  %81 = vmatpush1.msra.mxu0 0.0
  %82 = vmatprep.subr.mxu0 0.0
  %83 = vmatpush1.msra.mxu0 0.0
  %84 = vmatprep.subr.mxu0 0.0
  %85 = vmatpush1.msra.mxu0 0.0
  %86 = vmatprep.subr.mxu0 0.0
  %87 = vmatpush1.msra.mxu0 0.0
  %88 = vmatprep.subr.mxu0 0.0
  %89 = vmatpush1.msra.mxu0 0.0
  %90 = vmatprep.subr.mxu0 0.0
  %91 = vmatpush1.msra.mxu0 0.0
  %92 = vmatprep.subr.mxu0 0.0
  %93 = vmatpush1.msra.mxu0 0.0
  %94 = vmatprep.subr.mxu0 0.0
  %95 = vmatpush1.msra.mxu0 0.0
  %96 = vmatprep.subr.mxu0 0.0
  %97 = vmatpush1.msra.mxu0 0.0
  %98 = vmatprep.subr.mxu0 0.0
  %99 = vmatpush1.msra.mxu0 0.0
  %100 = vmatprep.subr.mxu0 0.0
  %101 = vmatpush1.msra.mxu0 0.0
  %102 = vmatprep.subr.mxu0 0.0
  %103 = vmatpush1.msra.mxu0 0.0
  %104 = vmatprep.subr.mxu0 0.0
  %105 = vmatpush1.msra.mxu0 0.0
  %106 = vmatprep.subr.mxu0 0.0
  %107 = vmatpush1.msra.mxu0 0.0
  %108 = vmatprep.subr.mxu0 0.0
  %109 = vmatpush1.msra.mxu0 0.0
  %110 = vmatprep.subr.mxu0 0.0
  %111 = vmatpush1.msra.mxu0 0.0
  %112 = vmatprep.subr.mxu0 0.0
  %113 = vmatpush1.msra.mxu0 0.0
  %114 = vmatprep.subr.mxu0 0.0
  %115 = vmatpush1.msra.mxu0 0.0
  %116 = vmatprep.subr.mxu0 0.0
  %117 = vmatpush1.msra.mxu0 0.0
  %118 = vmatprep.subr.mxu0 0.0
  %119 = vmatpush1.msra.mxu0 0.0
  %120 = vmatprep.subr.mxu0 0.0
  %121 = vmatpush1.msra.mxu0 0.0
  %122 = vmatprep.subr.mxu0 0.0
  %123 = vmatpush1.msra.mxu0 0.0
  %124 = vmatprep.mubr.f32.mxu0 0.0
  %125 = vmatmul.mubr.f32.gmra.mrb[0].mxu0 %v34
  %v126 = vpop.f32.mrb[0].mxu0
  %v127 = vadd.f32 0.0, %v126
  %v128 = vpop.f32.mrb[0].mxu0
  %129 = vmatprep.mubr.f32.mxu0 0.0
  %130 = vmatmul.mubr.f32.gmra.mrb[0].mxu0 %v37
  %v131 = vpop.f32.mrb[0].mxu0
  %v132 = vadd.f32 0.0, %v131
  %v133 = vpop.f32.mrb[0].mxu0
  %134 = vmatprep.mubr.f32.mxu0 0.0
  %135 = vmatmul.mubr.f32.gmra.mrb[0].mxu0 %v40
  %v136 = vpop.f32.mrb[0].mxu0
  %v137 = vadd.f32 0.0, %v136
  %v138 = vpop.f32.mrb[0].mxu0
  %139 = vmatprep.mubr.f32.mxu0 0.0
  %140 = vmatmul.mubr.f32.gmra.mrb[0].mxu0 %v43
  %v141 = vpop.f32.mrb[0].mxu0
  %v142 = vadd.f32 0.0, %v141
  %v143 = vpop.f32.mrb[0].mxu0
  %144 = vmatprep.mubr.f32.mxu0 0.0
  %145 = vmatmul.mubr.f32.gmra.mrb[0].mxu0 %v46
  %v146 = vpop.f32.mrb[0].mxu0
  %v147 = vadd.f32 0.0, %v146
  %v148 = vpop.f32.mrb[0].mxu0
  %149 = vmatprep.mubr.f32.mxu0 0.0
  %150 = vmatmul.mubr.f32.gmra.mrb[0].mxu0 %v49
  %v151 = vpop.f32.mrb[0].mxu0
  %v152 = vadd.f32 0.0, %v151
  %v153 = vpop.f32.mrb[0].mxu0
  %154 = vmatprep.mubr.f32.mxu0 0.0
  %155 = vmatmul.mubr.f32.gmra.mrb[0].mxu0 %v52
  %v156 = vpop.f32.mrb[0].mxu0
  %v157 = vadd.f32 0.0, %v156
  %v158 = vpop.f32.mrb[0].mxu0
  %159 = vmatprep.mubr.f32.mxu0 0.0
  %160 = vmatmul.mubr.f32.gmra.mrb[0].mxu0 %v55
  %v161 = vpop.f32.mrb[0].mxu0
  %v162 = vadd.f32 0.0, %v161
  %v163 = vpop.f32.mrb[0].mxu0
  %164 = vmatprep.mubr.f32.mxu0 0.0
  %165 = vmatmul.mubr.f32.gmra.mrb[0].mxu0 %v58
  %v166 = vpop.f32.mrb[0].mxu0
  %v167 = vadd.f32 0.0, %v166
  %v168 = vpop.f32.mrb[0].mxu0
  %169 = vdwg.mxu0
  %v170 = vld [vmem:[%s2] sm:$0xff]
  %v171 = vld [vmem:[%s2 + $0x8] sm:$0xff]
  %v172 = vld [vmem:[%s2 + $0x10] sm:$0xff]
  %v173 = vld [vmem:[%s2 + $0x18] sm:$0xff]
  %v174 = vld [vmem:[%s2 + $0x20] sm:$0xff]
  %v175 = vld [vmem:[%s2 + $0x28] sm:$0xff]
  %v176 = vld [vmem:[%s2 + $0x30] sm:$0xff]
  %v177 = vld [vmem:[%s2 + $0x38] sm:$0xff]
  %v178 = vld [vmem:[%s2 + $0x40] sm:$0xff]
  %v179 = vld [vmem:[%s2 + $0x48] sm:$0xff]
  %v180 = vld [vmem:[%s2 + $0x50] sm:$0xff]
  %v181 = vld [vmem:[%s2 + $0x58] sm:$0xff]
  %v182 = vld [vmem:[%s2 + $0x60] sm:$0xff]
  %v183 = vld [vmem:[%s2 + $0x68] sm:$0xff]
  %v184 = vld [vmem:[%s2 + $0x70] sm:$0xff]
  %v185 = vld [vmem:[%s2 + $0x78] sm:$0xff]
  %v186 = vld [vmem:[%s2 + $0x80] sm:$0xff]
  %v187 = vld [vmem:[%s2 + $0x88] sm:$0xff]
  %v188 = vld [vmem:[%s2 + $0x90] sm:$0xff]
  %v189 = vld [vmem:[%s2 + $0x98] sm:$0xff]
  %v190 = vld [vmem:[%s2 + $0xa0] sm:$0xff]
  %v191 = vld [vmem:[%s2 + $0xa8] sm:$0xff]
  %v192 = vld [vmem:[%s2 + $0xb0] sm:$0xff]
  %v193 = vld [vmem:[%s2 + $0xb8] sm:$0xff]
  %v194 = vld [vmem:[%s2 + $0xc0] sm:$0xff]
  %v195 = vld [vmem:[%s2 + $0xc8] sm:$0xff]
  %v196 = vld [vmem:[%s2 + $0xd0] sm:$0xff]
  %v197 = vld [vmem:[%s2 + $0xd8] sm:$0xff]
  %v198 = vld [vmem:[%s2 + $0xe0] sm:$0xff]
  %v199 = vld [vmem:[%s2 + $0xe8] sm:$0xff]
  %v200 = vld [vmem:[%s2 + $0xf0] sm:$0xff]
  %v201 = vld [vmem:[%s2 + $0xf8] sm:$0xff]
  %v202 = vld [vmem:[%s2 + $0x100] sm:$0xff]
  %v203 = vld [vmem:[%s2 + $0x108] sm:$0xff]
  %v204 = vld [vmem:[%s2 + $0x110] sm:$0xff]
  %v205 = vld [vmem:[%s2 + $0x118] sm:$0xff]
  %v206 = vld [vmem:[%s2 + $0x120] sm:$0xff]
  %v207 = vld [vmem:[%s2 + $0x128] sm:$0xff]
  %v208 = vld [vmem:[%s2 + $0x130] sm:$0xff]
  %v209 = vld [vmem:[%s2 + $0x138] sm:$0xff]
  %v210 = vld [vmem:[%s2 + $0x140] sm:$0xff]
  %v211 = vld [vmem:[%s2 + $0x148] sm:$0xff]
  %v212 = vld [vmem:[%s2 + $0x150] sm:$0xff]
  %v213 = vld [vmem:[%s2 + $0x158] sm:$0xff]
  %v214 = vld [vmem:[%s2 + $0x160] sm:$0xff]
  %v215 = vld [vmem:[%s2 + $0x168] sm:$0xff]
  %v216 = vld [vmem:[%s2 + $0x170] sm:$0xff]
  %v217 = vld [vmem:[%s2 + $0x178] sm:$0xff]
  %v218 = vld [vmem:[%s2 + $0x180] sm:$0xff]
  %v219 = vld [vmem:[%s2 + $0x188] sm:$0xff]
  %v220 = vld [vmem:[%s2 + $0x190] sm:$0xff]
  %v221 = vld [vmem:[%s2 + $0x198] sm:$0xff]
  %v222 = vld [vmem:[%s2 + $0x1a0] sm:$0xff]
  %v223 = vld [vmem:[%s2 + $0x1a8] sm:$0xff]
  %v224 = vld [vmem:[%s2 + $0x1b0] sm:$0xff]
  %v225 = vld [vmem:[%s2 + $0x1b8] sm:$0xff]
  %v226 = vld [vmem:[%s2 + $0x1c0] sm:$0xff]
  %v227 = vld [vmem:[%s2 + $0x1c8] sm:$0xff]
  %v228 = vld [vmem:[%s2 + $0x1d0] sm:$0xff]
  %v229 = vld [vmem:[%s2 + $0x1d8] sm:$0xff]
  %v230 = vld [vmem:[%s2 + $0x1e0] sm:$0xff]
  %v231 = vld [vmem:[%s2 + $0x1e8] sm:$0xff]
  %v232 = vld [vmem:[%s2 + $0x1f0] sm:$0xff]
  %v233 = vld [vmem:[%s2 + $0x1f8] sm:$0xff]
  %v234 = vld [vmem:[%s2 + $0x200] sm:$0xff]
  %v235 = vld [vmem:[%s2 + $0x208] sm:$0xff]
  %v236 = vld [vmem:[%s2 + $0x210] sm:$0xff]
  %v237 = vld [vmem:[%s2 + $0x218] sm:$0xff]
  %v238 = vld [vmem:[%s3] sm:$0xff]
  %v239 = vld [vmem:[%s3 + $0x8] sm:$0xff]
  %v240 = vld [vmem:[%s3 + $0x10] sm:$0xff]
  %v241 = vld [vmem:[%s3 + $0x18] sm:$0xff]
  %v242 = vld [vmem:[%s3 + $0x20] sm:$0xff]
  %v243 = vld [vmem:[%s3 + $0x28] sm:$0xff]
  %v244 = vld [vmem:[%s3 + $0x30] sm:$0xff]
  %v245 = vld [vmem:[%s3 + $0x38] sm:$0xff]
  %v246 = vld [vmem:[%s3 + $0x40] sm:$0xff]
  %v247 = vld [vmem:[%s3 + $0x48] sm:$0xff]
  %v248 = vld [vmem:[%s3 + $0x50] sm:$0xff]
  %v249 = vld [vmem:[%s3 + $0x58] sm:$0xff]
  %v250 = vld [vmem:[%s3 + $0x60] sm:$0xff]
  %v251 = vld [vmem:[%s3 + $0x68] sm:$0xff]
  %v252 = vld [vmem:[%s3 + $0x70] sm:$0xff]
  %v253 = vld [vmem:[%s3 + $0x78] sm:$0xff]
  %v254 = vld [vmem:[%s3 + $0x80] sm:$0xff]
  %v255 = vld [vmem:[%s3 + $0x88] sm:$0xff]
  %v256 = vld [vmem:[%s3 + $0x90] sm:$0xff]
  %v257 = vld [vmem:[%s3 + $0x98] sm:$0xff]
  %v258 = vld [vmem:[%s3 + $0xa0] sm:$0xff]
  %v259 = vld [vmem:[%s3 + $0xa8] sm:$0xff]
  %v260 = vld [vmem:[%s3 + $0xb0] sm:$0xff]
  %v261 = vld [vmem:[%s3 + $0xb8] sm:$0xff]
  %v262 = vld [vmem:[%s3 + $0xc0] sm:$0xff]
  %v263 = vld [vmem:[%s3 + $0xc8] sm:$0xff]
  %v264 = vld [vmem:[%s3 + $0xd0] sm:$0xff]
  %v265 = vld [vmem:[%s3 + $0xd8] sm:$0xff]
  %v266 = vld [vmem:[%s3 + $0xe0] sm:$0xff]
  %v267 = vld [vmem:[%s3 + $0xe8] sm:$0xff]
  %v268 = vld [vmem:[%s3 + $0xf0] sm:$0xff]
  %v269 = vld [vmem:[%s3 + $0xf8] sm:$0xff]
  %v270 = vld [vmem:[%s3 + $0x100] sm:$0xff]
  %v271 = vld [vmem:[%s3 + $0x108] sm:$0xff]
  %v272 = vld [vmem:[%s3 + $0x110] sm:$0xff]
  %v273 = vld [vmem:[%s3 + $0x118] sm:$0xff]
  %v274 = vld [vmem:[%s3 + $0x120] sm:$0xff]
  %v275 = vld [vmem:[%s3 + $0x128] sm:$0xff]
  %v276 = vld [vmem:[%s3 + $0x130] sm:$0xff]
  %v277 = vld [vmem:[%s3 + $0x138] sm:$0xff]
  %v278 = vld [vmem:[%s3 + $0x140] sm:$0xff]
  %v279 = vld [vmem:[%s3 + $0x148] sm:$0xff]
  %v280 = vld [vmem:[%s3 + $0x150] sm:$0xff]
  %v281 = vld [vmem:[%s3 + $0x158] sm:$0xff]
  %v282 = vld [vmem:[%s3 + $0x160] sm:$0xff]
  %v283 = vld [vmem:[%s3 + $0x168] sm:$0xff]
  %v284 = vld [vmem:[%s3 + $0x170] sm:$0xff]
  %v285 = vld [vmem:[%s3 + $0x178] sm:$0xff]
  %v286 = vld [vmem:[%s3 + $0x180] sm:$0xff]
  %v287 = vld [vmem:[%s3 + $0x188] sm:$0xff]
  %v288 = vld [vmem:[%s3 + $0x190] sm:$0xff]
  %v289 = vld [vmem:[%s3 + $0x198] sm:$0xff]
  %v290 = vld [vmem:[%s3 + $0x1a0] sm:$0xff]
  %v291 = vld [vmem:[%s3 + $0x1a8] sm:$0xff]
  %v292 = vld [vmem:[%s3 + $0x1b0] sm:$0xff]
  %v293 = vld [vmem:[%s3 + $0x1b8] sm:$0xff]
  %v294 = vld [vmem:[%s3 + $0x1c0] sm:$0xff]
  %v295 = vld [vmem:[%s3 + $0x1c8] sm:$0xff]
  %v296 = vld [vmem:[%s3 + $0x1d0] sm:$0xff]
  %v297 = vld [vmem:[%s3 + $0x1d8] sm:$0xff]
  %v298 = vld [vmem:[%s3 + $0x1e0] sm:$0xff]
  %v299 = vld [vmem:[%s3 + $0x1e8] sm:$0xff]
  %v300 = vld [vmem:[%s3 + $0x1f0] sm:$0xff]
  %v301 = vld [vmem:[%s3 + $0x1f8] sm:$0xff]
  %v302 = vld [vmem:[%s3 + $0x200] sm:$0xff]
  %v303 = vld [vmem:[%s3 + $0x208] sm:$0xff]
  %v304 = vld [vmem:[%s3 + $0x210] sm:$0xff]
  %v305 = vld [vmem:[%s3 + $0x218] sm:$0xff]
  %315 = vrot.lane.b32.xlu0 %v127, 111
  %v316 = vpop.permute.xlu0 %315
  %317 = vrot.lane.b32.xlu0 %v132, 111
  %v318 = vpop.permute.xlu0 %317
  %319 = vrot.lane.b32.xlu0 %v137, 111
  %v320 = vpop.permute.xlu0 %319
  %321 = vrot.lane.b32.xlu0 %v142, 111
  %v322 = vpop.permute.xlu0 %321
  %323 = vrot.lane.b32.xlu0 %v147, 111
  %v324 = vpop.permute.xlu0 %323
  %325 = vrot.lane.b32.xlu0 %v152, 111
  %v326 = vpop.permute.xlu0 %325
  %327 = vrot.lane.b32.xlu0 %v157, 111
  %v328 = vpop.permute.xlu0 %327
  %329 = vrot.lane.b32.xlu0 %v162, 111
  %v330 = vpop.permute.xlu0 %329
  %331 = vrot.lane.b32.xlu0 %v167, 111
  %v332 = vpop.permute.xlu0 %331
  %vm342 = vcmask 588800
  %v344 = vsel %vm342, %v238, 0
  %v347 = vsel %vm342, %v239, 0
  %v350 = vsel %vm342, %v240, 0
  %v353 = vsel %vm342, %v241, 0
  %v356 = vsel %vm342, %v242, 0
  %v359 = vsel %vm342, %v243, 0
  %v362 = vsel %vm342, %v244, 0
  %v365 = vsel %vm342, %v245, 0
  %v368 = vsel %vm342, %v246, 0
  %v371 = vsel %vm342, %v247, 0
  %v374 = vsel %vm342, %v248, 0
  %v377 = vsel %vm342, %v249, 0
  %v380 = vsel %vm342, %v250, 0
  %v383 = vsel %vm342, %v251, 0
  %v386 = vsel %vm342, %v252, 0
  %v389 = vsel %vm342, %v253, 0
  %v392 = vsel %vm342, %v254, 0
  %v395 = vsel %vm342, %v255, 0
  %v398 = vsel %vm342, %v256, 0
  %v401 = vsel %vm342, %v257, 0
  %v404 = vsel %vm342, %v258, 0
  %v407 = vsel %vm342, %v259, 0
  %v410 = vsel %vm342, %v260, 0
  %v413 = vsel %vm342, %v261, 0
  %v416 = vsel %vm342, %v262, 0
  %v419 = vsel %vm342, %v263, 0
  %v422 = vsel %vm342, %v264, 0
  %v425 = vsel %vm342, %v265, 0
  %v428 = vsel %vm342, %v266, 0
  %v431 = vsel %vm342, %v267, 0
  %v434 = vsel %vm342, %v268, 0
  %v437 = vsel %vm342, %v269, 0
  %v440 = vsel %vm342, %v270, 0
  %v443 = vsel %vm342, %v271, 0
  %v446 = vsel %vm342, %v272, 0
  %v449 = vsel %vm342, %v273, 0
  %v452 = vsel %vm342, %v274, 0
  %v455 = vsel %vm342, %v275, 0
  %v458 = vsel %vm342, %v276, 0
  %v461 = vsel %vm342, %v277, 0
  %v464 = vsel %vm342, %v278, 0
  %v467 = vsel %vm342, %v279, 0
  %v470 = vsel %vm342, %v280, 0
  %v473 = vsel %vm342, %v281, 0
  %v476 = vsel %vm342, %v282, 0
  %v479 = vsel %vm342, %v283, 0
  %v482 = vsel %vm342, %v284, 0
  %v485 = vsel %vm342, %v285, 0
  %v488 = vsel %vm342, %v286, 0
  %v491 = vsel %vm342, %v287, 0
  %v494 = vsel %vm342, %v288, 0
  %v497 = vsel %vm342, %v289, 0
  %v500 = vsel %vm342, %v290, 0
  %v503 = vsel %vm342, %v291, 0
  %v506 = vsel %vm342, %v292, 0
  %v509 = vsel %vm342, %v293, 0
  %v512 = vsel %vm342, %v294, 0
  %v515 = vsel %vm342, %v295, 0
  %v518 = vsel %vm342, %v296, 0
  %v521 = vsel %vm342, %v297, 0
  %v524 = vsel %vm342, %v298, 0
  %v527 = vsel %vm342, %v299, 0
  %v530 = vsel %vm342, %v300, 0
  %v533 = vsel %vm342, %v301, 0
  %v536 = vsel %vm342, %v302, 0
  %v539 = vsel %vm342, %v303, 0
  %v542 = vsel %vm342, %v304, 0
  %v545 = vsel %vm342, %v305, 0
  %547 = vmatprep.subr.mxu0 0.0
  %548 = vmatpush1.msra.mxu0 %v316
  %549 = vmatprep.subr.mxu0 0.0
  %550 = vmatpush1.msra.mxu0 %v318
  %551 = vmatprep.subr.mxu0 0.0
  %552 = vmatpush1.msra.mxu0 %v320
  %553 = vmatprep.subr.mxu0 0.0
  %554 = vmatpush1.msra.mxu0 %v322
  %555 = vmatprep.subr.mxu0 0.0
  %556 = vmatpush1.msra.mxu0 %v324
  %557 = vmatprep.subr.mxu0 0.0
  %558 = vmatpush1.msra.mxu0 %v326
  %559 = vmatprep.subr.mxu0 0.0
  %560 = vmatpush1.msra.mxu0 %v328
  %561 = vmatprep.subr.mxu0 0.0
  %562 = vmatpush1.msra.mxu0 %v330
  %563 = vmatprep.subr.mxu0 0.0
  %564 = vmatpush1.msra.mxu0 %v332
  %565 = vmatprep.subr.mxu0 0.0
  %566 = vmatpush1.msra.mxu0 0.0
  %567 = vmatprep.subr.mxu0 0.0
  %568 = vmatpush1.msra.mxu0 0.0
  %569 = vmatprep.subr.mxu0 0.0
  %570 = vmatpush1.msra.mxu0 0.0
  %571 = vmatprep.subr.mxu0 0.0
  %572 = vmatpush1.msra.mxu0 0.0
  %573 = vmatprep.subr.mxu0 0.0
  %574 = vmatpush1.msra.mxu0 0.0
  %575 = vmatprep.subr.mxu0 0.0
  %576 = vmatpush1.msra.mxu0 0.0
  %577 = vmatprep.subr.mxu0 0.0
  %578 = vmatpush1.msra.mxu0 0.0
  %579 = vmatprep.subr.mxu0 0.0
  %580 = vmatpush1.msra.mxu0 0.0
  %581 = vmatprep.subr.mxu0 0.0
  %582 = vmatpush1.msra.mxu0 0.0
  %583 = vmatprep.subr.mxu0 0.0
  %584 = vmatpush1.msra.mxu0 0.0
  %585 = vmatprep.subr.mxu0 0.0
  %586 = vmatpush1.msra.mxu0 0.0
  %587 = vmatprep.subr.mxu0 0.0
  %588 = vmatpush1.msra.mxu0 0.0
  %589 = vmatprep.subr.mxu0 0.0
  %590 = vmatpush1.msra.mxu0 0.0
  %591 = vmatprep.subr.mxu0 0.0
  %592 = vmatpush1.msra.mxu0 0.0
  %593 = vmatprep.subr.mxu0 0.0
  %594 = vmatpush1.msra.mxu0 0.0
  %595 = vmatprep.subr.mxu0 0.0
  %596 = vmatpush1.msra.mxu0 0.0
  %597 = vmatprep.subr.mxu0 0.0
  %598 = vmatpush1.msra.mxu0 0.0
  %599 = vmatprep.subr.mxu0 0.0
  %600 = vmatpush1.msra.mxu0 0.0
  %601 = vmatprep.subr.mxu0 0.0
  %602 = vmatpush1.msra.mxu0 0.0
  %603 = vmatprep.subr.mxu0 0.0
  %604 = vmatpush1.msra.mxu0 0.0
  %605 = vmatprep.subr.mxu0 0.0
  %606 = vmatpush1.msra.mxu0 0.0
  %607 = vmatprep.subr.mxu0 0.0
  %608 = vmatpush1.msra.mxu0 0.0
  %609 = vmatprep.subr.mxu0 0.0
  %610 = vmatpush1.msra.mxu0 0.0
  %611 = vmatprep.mubr.f32.mxu0 0.0
  %612 = vmatmul.mubr.f32.gmra.mrb[0].mxu0 %v344
  %v613 = vpop.f32.mrb[0].mxu0
  %v614 = vadd.f32 0.0, %v613
  %v615 = vpop.f32.mrb[0].mxu0
  %616 = vmatprep.mubr.f32.mxu0 0.0
  %617 = vmatmul.mubr.f32.gmra.mrb[0].mxu0 %v347
  %v618 = vpop.f32.mrb[0].mxu0
  %v619 = vadd.f32 0.0, %v618
  %v620 = vpop.f32.mrb[0].mxu0
  %621 = vmatprep.mubr.f32.mxu0 0.0
  %622 = vmatmul.mubr.f32.gmra.mrb[0].mxu0 %v350
  %v623 = vpop.f32.mrb[0].mxu0
  %v624 = vadd.f32 0.0, %v623
  %v625 = vpop.f32.mrb[0].mxu0
  %626 = vmatprep.mubr.f32.mxu0 0.0
  %627 = vmatmul.mubr.f32.gmra.mrb[0].mxu0 %v353
  %v628 = vpop.f32.mrb[0].mxu0
  %v629 = vadd.f32 0.0, %v628
  %v630 = vpop.f32.mrb[0].mxu0
  %631 = vmatprep.mubr.f32.mxu0 0.0
  %632 = vmatmul.mubr.f32.gmra.mrb[0].mxu0 %v356
  %v633 = vpop.f32.mrb[0].mxu0
  %v634 = vadd.f32 0.0, %v633
  %v635 = vpop.f32.mrb[0].mxu0
  %636 = vmatprep.mubr.f32.mxu0 0.0
  %637 = vmatmul.mubr.f32.gmra.mrb[0].mxu0 %v359
  %v638 = vpop.f32.mrb[0].mxu0
  %v639 = vadd.f32 0.0, %v638
  %v640 = vpop.f32.mrb[0].mxu0
  %641 = vmatprep.mubr.f32.mxu0 0.0
  %642 = vmatmul.mubr.f32.gmra.mrb[0].mxu0 %v362
  %v643 = vpop.f32.mrb[0].mxu0
  %v644 = vadd.f32 0.0, %v643
  %v645 = vpop.f32.mrb[0].mxu0
  %646 = vmatprep.mubr.f32.mxu0 0.0
  %647 = vmatmul.mubr.f32.gmra.mrb[0].mxu0 %v365
  %v648 = vpop.f32.mrb[0].mxu0
  %v649 = vadd.f32 0.0, %v648
  %v650 = vpop.f32.mrb[0].mxu0
  %651 = vmatprep.mubr.f32.mxu0 0.0
  %652 = vmatmul.mubr.f32.gmra.mrb[0].mxu0 %v368
  %v653 = vpop.f32.mrb[0].mxu0
  %v654 = vadd.f32 0.0, %v653
  %v655 = vpop.f32.mrb[0].mxu0
  %656 = vmatprep.mubr.f32.mxu0 0.0
  %657 = vmatmul.mubr.f32.gmra.mrb[0].mxu0 %v371
  %v658 = vpop.f32.mrb[0].mxu0
  %v659 = vadd.f32 0.0, %v658
  %v660 = vpop.f32.mrb[0].mxu0
  %661 = vmatprep.mubr.f32.mxu0 0.0
  %662 = vmatmul.mubr.f32.gmra.mrb[0].mxu0 %v374
  %v663 = vpop.f32.mrb[0].mxu0
  %v664 = vadd.f32 0.0, %v663
  %v665 = vpop.f32.mrb[0].mxu0
  %666 = vmatprep.mubr.f32.mxu0 0.0
  %667 = vmatmul.mubr.f32.gmra.mrb[0].mxu0 %v377
  %v668 = vpop.f32.mrb[0].mxu0
  %v669 = vadd.f32 0.0, %v668
  %v670 = vpop.f32.mrb[0].mxu0
  %671 = vmatprep.mubr.f32.mxu0 0.0
  %672 = vmatmul.mubr.f32.gmra.mrb[0].mxu0 %v380
  %v673 = vpop.f32.mrb[0].mxu0
  %v674 = vadd.f32 0.0, %v673
  %v675 = vpop.f32.mrb[0].mxu0
  %676 = vmatprep.mubr.f32.mxu0 0.0
  %677 = vmatmul.mubr.f32.gmra.mrb[0].mxu0 %v383
  %v678 = vpop.f32.mrb[0].mxu0
  %v679 = vadd.f32 0.0, %v678
  %v680 = vpop.f32.mrb[0].mxu0
  %681 = vmatprep.mubr.f32.mxu0 0.0
  %682 = vmatmul.mubr.f32.gmra.mrb[0].mxu0 %v386
  %v683 = vpop.f32.mrb[0].mxu0
  %v684 = vadd.f32 0.0, %v683
  %v685 = vpop.f32.mrb[0].mxu0
  %686 = vmatprep.mubr.f32.mxu0 0.0
  %687 = vmatmul.mubr.f32.gmra.mrb[0].mxu0 %v389
  %v688 = vpop.f32.mrb[0].mxu0
  %v689 = vadd.f32 0.0, %v688
  %v690 = vpop.f32.mrb[0].mxu0
  %691 = vmatprep.mubr.f32.mxu0 0.0
  %692 = vmatmul.mubr.f32.gmra.mrb[0].mxu0 %v392
  %v693 = vpop.f32.mrb[0].mxu0
  %v694 = vadd.f32 0.0, %v693
  %v695 = vpop.f32.mrb[0].mxu0
  %696 = vmatprep.mubr.f32.mxu0 0.0
  %697 = vmatmul.mubr.f32.gmra.mrb[0].mxu0 %v395
  %v698 = vpop.f32.mrb[0].mxu0
  %v699 = vadd.f32 0.0, %v698
  %v700 = vpop.f32.mrb[0].mxu0
  %701 = vmatprep.mubr.f32.mxu0 0.0
  %702 = vmatmul.mubr.f32.gmra.mrb[0].mxu0 %v398
  %v703 = vpop.f32.mrb[0].mxu0
  %v704 = vadd.f32 0.0, %v703
  %v705 = vpop.f32.mrb[0].mxu0
  %706 = vmatprep.mubr.f32.mxu0 0.0
  %707 = vmatmul.mubr.f32.gmra.mrb[0].mxu0 %v401
  %v708 = vpop.f32.mrb[0].mxu0
  %v709 = vadd.f32 0.0, %v708
  %v710 = vpop.f32.mrb[0].mxu0
  %711 = vmatprep.mubr.f32.mxu0 0.0
  %712 = vmatmul.mubr.f32.gmra.mrb[0].mxu0 %v404
  %v713 = vpop.f32.mrb[0].mxu0
  %v714 = vadd.f32 0.0, %v713
  %v715 = vpop.f32.mrb[0].mxu0
  %716 = vmatprep.mubr.f32.mxu0 0.0
  %717 = vmatmul.mubr.f32.gmra.mrb[0].mxu0 %v407
  %v718 = vpop.f32.mrb[0].mxu0
  %v719 = vadd.f32 0.0, %v718
  %v720 = vpop.f32.mrb[0].mxu0
  %721 = vmatprep.mubr.f32.mxu0 0.0
  %722 = vmatmul.mubr.f32.gmra.mrb[0].mxu0 %v410
  %v723 = vpop.f32.mrb[0].mxu0
  %v724 = vadd.f32 0.0, %v723
  %v725 = vpop.f32.mrb[0].mxu0
  %726 = vmatprep.mubr.f32.mxu0 0.0
  %727 = vmatmul.mubr.f32.gmra.mrb[0].mxu0 %v413
  %v728 = vpop.f32.mrb[0].mxu0
  %v729 = vadd.f32 0.0, %v728
  %v730 = vpop.f32.mrb[0].mxu0
  %731 = vmatprep.mubr.f32.mxu0 0.0
  %732 = vmatmul.mubr.f32.gmra.mrb[0].mxu0 %v416
  %v733 = vpop.f32.mrb[0].mxu0
  %v734 = vadd.f32 0.0, %v733
  %v735 = vpop.f32.mrb[0].mxu0
  %736 = vmatprep.mubr.f32.mxu0 0.0
  %737 = vmatmul.mubr.f32.gmra.mrb[0].mxu0 %v419
  %v738 = vpop.f32.mrb[0].mxu0
  %v739 = vadd.f32 0.0, %v738
  %v740 = vpop.f32.mrb[0].mxu0
  %741 = vmatprep.mubr.f32.mxu0 0.0
  %742 = vmatmul.mubr.f32.gmra.mrb[0].mxu0 %v422
  %v743 = vpop.f32.mrb[0].mxu0
  %v744 = vadd.f32 0.0, %v743
  %v745 = vpop.f32.mrb[0].mxu0
  %746 = vmatprep.mubr.f32.mxu0 0.0
  %747 = vmatmul.mubr.f32.gmra.mrb[0].mxu0 %v425
  %v748 = vpop.f32.mrb[0].mxu0
  %v749 = vadd.f32 0.0, %v748
  %v750 = vpop.f32.mrb[0].mxu0
  %751 = vmatprep.mubr.f32.mxu0 0.0
  %752 = vmatmul.mubr.f32.gmra.mrb[0].mxu0 %v428
  %v753 = vpop.f32.mrb[0].mxu0
  %v754 = vadd.f32 0.0, %v753
  %v755 = vpop.f32.mrb[0].mxu0
  %756 = vmatprep.mubr.f32.mxu0 0.0
  %757 = vmatmul.mubr.f32.gmra.mrb[0].mxu0 %v431
  %v758 = vpop.f32.mrb[0].mxu0
  %v759 = vadd.f32 0.0, %v758
  %v760 = vpop.f32.mrb[0].mxu0
  %761 = vmatprep.mubr.f32.mxu0 0.0
  %762 = vmatmul.mubr.f32.gmra.mrb[0].mxu0 %v434
  %v763 = vpop.f32.mrb[0].mxu0
  %v764 = vadd.f32 0.0, %v763
  %v765 = vpop.f32.mrb[0].mxu0
  %766 = vmatprep.mubr.f32.mxu0 0.0
  %767 = vmatmul.mubr.f32.gmra.mrb[0].mxu0 %v437
  %v768 = vpop.f32.mrb[0].mxu0
  %v769 = vadd.f32 0.0, %v768
  %v770 = vpop.f32.mrb[0].mxu0
  %771 = vmatprep.mubr.f32.mxu0 0.0
  %772 = vmatmul.mubr.f32.gmra.mrb[0].mxu0 %v440
  %v773 = vpop.f32.mrb[0].mxu0
  %v774 = vadd.f32 0.0, %v773
  %v775 = vpop.f32.mrb[0].mxu0
  %776 = vmatprep.mubr.f32.mxu0 0.0
  %777 = vmatmul.mubr.f32.gmra.mrb[0].mxu0 %v443
  %v778 = vpop.f32.mrb[0].mxu0
  %v779 = vadd.f32 0.0, %v778
  %v780 = vpop.f32.mrb[0].mxu0
  %781 = vmatprep.mubr.f32.mxu0 0.0
  %782 = vmatmul.mubr.f32.gmra.mrb[0].mxu0 %v446
  %v783 = vpop.f32.mrb[0].mxu0
  %v784 = vadd.f32 0.0, %v783
  %v785 = vpop.f32.mrb[0].mxu0
  %786 = vmatprep.mubr.f32.mxu0 0.0
  %787 = vmatmul.mubr.f32.gmra.mrb[0].mxu0 %v449
  %v788 = vpop.f32.mrb[0].mxu0
  %v789 = vadd.f32 0.0, %v788
  %v790 = vpop.f32.mrb[0].mxu0
  %791 = vmatprep.mubr.f32.mxu0 0.0
  %792 = vmatmul.mubr.f32.gmra.mrb[0].mxu0 %v452
  %v793 = vpop.f32.mrb[0].mxu0
  %v794 = vadd.f32 0.0, %v793
  %v795 = vpop.f32.mrb[0].mxu0
  %796 = vmatprep.mubr.f32.mxu0 0.0
  %797 = vmatmul.mubr.f32.gmra.mrb[0].mxu0 %v455
  %v798 = vpop.f32.mrb[0].mxu0
  %v799 = vadd.f32 0.0, %v798
  %v800 = vpop.f32.mrb[0].mxu0
  %801 = vmatprep.mubr.f32.mxu0 0.0
  %802 = vmatmul.mubr.f32.gmra.mrb[0].mxu0 %v458
  %v803 = vpop.f32.mrb[0].mxu0
  %v804 = vadd.f32 0.0, %v803
  %v805 = vpop.f32.mrb[0].mxu0
  %806 = vmatprep.mubr.f32.mxu0 0.0
  %807 = vmatmul.mubr.f32.gmra.mrb[0].mxu0 %v461
  %v808 = vpop.f32.mrb[0].mxu0
  %v809 = vadd.f32 0.0, %v808
  %v810 = vpop.f32.mrb[0].mxu0
  %811 = vmatprep.mubr.f32.mxu0 0.0
  %812 = vmatmul.mubr.f32.gmra.mrb[0].mxu0 %v464
  %v813 = vpop.f32.mrb[0].mxu0
  %v814 = vadd.f32 0.0, %v813
  %v815 = vpop.f32.mrb[0].mxu0
  %816 = vmatprep.mubr.f32.mxu0 0.0
  %817 = vmatmul.mubr.f32.gmra.mrb[0].mxu0 %v467
  %v818 = vpop.f32.mrb[0].mxu0
  %v819 = vadd.f32 0.0, %v818
  %v820 = vpop.f32.mrb[0].mxu0
  %821 = vmatprep.mubr.f32.mxu0 0.0
  %822 = vmatmul.mubr.f32.gmra.mrb[0].mxu0 %v470
  %v823 = vpop.f32.mrb[0].mxu0
  %v824 = vadd.f32 0.0, %v823
  %v825 = vpop.f32.mrb[0].mxu0
  %826 = vmatprep.mubr.f32.mxu0 0.0
  %827 = vmatmul.mubr.f32.gmra.mrb[0].mxu0 %v473
  %v828 = vpop.f32.mrb[0].mxu0
  %v829 = vadd.f32 0.0, %v828
  %v830 = vpop.f32.mrb[0].mxu0
  %831 = vmatprep.mubr.f32.mxu0 0.0
  %832 = vmatmul.mubr.f32.gmra.mrb[0].mxu0 %v476
  %v833 = vpop.f32.mrb[0].mxu0
  %v834 = vadd.f32 0.0, %v833
  %v835 = vpop.f32.mrb[0].mxu0
  %836 = vmatprep.mubr.f32.mxu0 0.0
  %837 = vmatmul.mubr.f32.gmra.mrb[0].mxu0 %v479
  %v838 = vpop.f32.mrb[0].mxu0
  %v839 = vadd.f32 0.0, %v838
  %v840 = vpop.f32.mrb[0].mxu0
  %841 = vmatprep.mubr.f32.mxu0 0.0
  %842 = vmatmul.mubr.f32.gmra.mrb[0].mxu0 %v482
  %v843 = vpop.f32.mrb[0].mxu0
  %v844 = vadd.f32 0.0, %v843
  %v845 = vpop.f32.mrb[0].mxu0
  %846 = vmatprep.mubr.f32.mxu0 0.0
  %847 = vmatmul.mubr.f32.gmra.mrb[0].mxu0 %v485
  %v848 = vpop.f32.mrb[0].mxu0
  %v849 = vadd.f32 0.0, %v848
  %v850 = vpop.f32.mrb[0].mxu0
  %851 = vmatprep.mubr.f32.mxu0 0.0
  %852 = vmatmul.mubr.f32.gmra.mrb[0].mxu0 %v488
  %v853 = vpop.f32.mrb[0].mxu0
  %v854 = vadd.f32 0.0, %v853
  %v855 = vpop.f32.mrb[0].mxu0
  %856 = vmatprep.mubr.f32.mxu0 0.0
  %857 = vmatmul.mubr.f32.gmra.mrb[0].mxu0 %v491
  %v858 = vpop.f32.mrb[0].mxu0
  %v859 = vadd.f32 0.0, %v858
  %v860 = vpop.f32.mrb[0].mxu0
  %861 = vmatprep.mubr.f32.mxu0 0.0
  %862 = vmatmul.mubr.f32.gmra.mrb[0].mxu0 %v494
  %v863 = vpop.f32.mrb[0].mxu0
  %v864 = vadd.f32 0.0, %v863
  %v865 = vpop.f32.mrb[0].mxu0
  %866 = vmatprep.mubr.f32.mxu0 0.0
  %867 = vmatmul.mubr.f32.gmra.mrb[0].mxu0 %v497
  %v868 = vpop.f32.mrb[0].mxu0
  %v869 = vadd.f32 0.0, %v868
  %v870 = vpop.f32.mrb[0].mxu0
  %871 = vmatprep.mubr.f32.mxu0 0.0
  %872 = vmatmul.mubr.f32.gmra.mrb[0].mxu0 %v500
  %v873 = vpop.f32.mrb[0].mxu0
  %v874 = vadd.f32 0.0, %v873
  %v875 = vpop.f32.mrb[0].mxu0
  %876 = vmatprep.mubr.f32.mxu0 0.0
  %877 = vmatmul.mubr.f32.gmra.mrb[0].mxu0 %v503
  %v878 = vpop.f32.mrb[0].mxu0
  %v879 = vadd.f32 0.0, %v878
  %v880 = vpop.f32.mrb[0].mxu0
  %881 = vmatprep.mubr.f32.mxu0 0.0
  %882 = vmatmul.mubr.f32.gmra.mrb[0].mxu0 %v506
  %v883 = vpop.f32.mrb[0].mxu0
  %v884 = vadd.f32 0.0, %v883
  %v885 = vpop.f32.mrb[0].mxu0
  %886 = vmatprep.mubr.f32.mxu0 0.0
  %887 = vmatmul.mubr.f32.gmra.mrb[0].mxu0 %v509
  %v888 = vpop.f32.mrb[0].mxu0
  %v889 = vadd.f32 0.0, %v888
  %v890 = vpop.f32.mrb[0].mxu0
  %891 = vmatprep.mubr.f32.mxu0 0.0
  %892 = vmatmul.mubr.f32.gmra.mrb[0].mxu0 %v512
  %v893 = vpop.f32.mrb[0].mxu0
  %v894 = vadd.f32 0.0, %v893
  %v895 = vpop.f32.mrb[0].mxu0
  %896 = vmatprep.mubr.f32.mxu0 0.0
  %897 = vmatmul.mubr.f32.gmra.mrb[0].mxu0 %v515
  %v898 = vpop.f32.mrb[0].mxu0
  %v899 = vadd.f32 0.0, %v898
  %v900 = vpop.f32.mrb[0].mxu0
  %901 = vmatprep.mubr.f32.mxu0 0.0
  %902 = vmatmul.mubr.f32.gmra.mrb[0].mxu0 %v518
  %v903 = vpop.f32.mrb[0].mxu0
  %v904 = vadd.f32 0.0, %v903
  %v905 = vpop.f32.mrb[0].mxu0
  %906 = vmatprep.mubr.f32.mxu0 0.0
  %907 = vmatmul.mubr.f32.gmra.mrb[0].mxu0 %v521
  %v908 = vpop.f32.mrb[0].mxu0
  %v909 = vadd.f32 0.0, %v908
  %v910 = vpop.f32.mrb[0].mxu0
  %911 = vmatprep.mubr.f32.mxu0 0.0
  %912 = vmatmul.mubr.f32.gmra.mrb[0].mxu0 %v524
  %v913 = vpop.f32.mrb[0].mxu0
  %v914 = vadd.f32 0.0, %v913
  %v915 = vpop.f32.mrb[0].mxu0
  %916 = vmatprep.mubr.f32.mxu0 0.0
  %917 = vmatmul.mubr.f32.gmra.mrb[0].mxu0 %v527
  %v918 = vpop.f32.mrb[0].mxu0
  %v919 = vadd.f32 0.0, %v918
  %v920 = vpop.f32.mrb[0].mxu0
  %921 = vmatprep.mubr.f32.mxu0 0.0
  %922 = vmatmul.mubr.f32.gmra.mrb[0].mxu0 %v530
  %v923 = vpop.f32.mrb[0].mxu0
  %v924 = vadd.f32 0.0, %v923
  %v925 = vpop.f32.mrb[0].mxu0
  %926 = vmatprep.mubr.f32.mxu0 0.0
  %927 = vmatmul.mubr.f32.gmra.mrb[0].mxu0 %v533
  %v928 = vpop.f32.mrb[0].mxu0
  %v929 = vadd.f32 0.0, %v928
  %v930 = vpop.f32.mrb[0].mxu0
  %931 = vmatprep.mubr.f32.mxu0 0.0
  %932 = vmatmul.mubr.f32.gmra.mrb[0].mxu0 %v536
  %v933 = vpop.f32.mrb[0].mxu0
  %v934 = vadd.f32 0.0, %v933
  %v935 = vpop.f32.mrb[0].mxu0
  %936 = vmatprep.mubr.f32.mxu0 0.0
  %937 = vmatmul.mubr.f32.gmra.mrb[0].mxu0 %v539
  %v938 = vpop.f32.mrb[0].mxu0
  %v939 = vadd.f32 0.0, %v938
  %v940 = vpop.f32.mrb[0].mxu0
  %941 = vmatprep.mubr.f32.mxu0 0.0
  %942 = vmatmul.mubr.f32.gmra.mrb[0].mxu0 %v542
  %v943 = vpop.f32.mrb[0].mxu0
  %v944 = vadd.f32 0.0, %v943
  %v945 = vpop.f32.mrb[0].mxu0
  %946 = vmatprep.mubr.f32.mxu0 0.0
  %947 = vmatmul.mubr.f32.gmra.mrb[0].mxu0 %v545
  %v948 = vpop.f32.mrb[0].mxu0
  %v949 = vadd.f32 0.0, %v948
  %v950 = vpop.f32.mrb[0].mxu0
  %951 = vdwg.mxu0
  %v953 = vsel %vm342, %v170, 0
  %v956 = vsel %vm342, %v171, 0
  %v959 = vsel %vm342, %v172, 0
  %v962 = vsel %vm342, %v173, 0
  %v965 = vsel %vm342, %v174, 0
  %v968 = vsel %vm342, %v175, 0
  %v971 = vsel %vm342, %v176, 0
  %v974 = vsel %vm342, %v177, 0
  %v977 = vsel %vm342, %v178, 0
  %v980 = vsel %vm342, %v179, 0
  %v983 = vsel %vm342, %v180, 0
  %v986 = vsel %vm342, %v181, 0
  %v989 = vsel %vm342, %v182, 0
  %v992 = vsel %vm342, %v183, 0
  %v995 = vsel %vm342, %v184, 0
  %v998 = vsel %vm342, %v185, 0
  %v1001 = vsel %vm342, %v186, 0
  %v1004 = vsel %vm342, %v187, 0
  %v1007 = vsel %vm342, %v188, 0
  %v1010 = vsel %vm342, %v189, 0
  %v1013 = vsel %vm342, %v190, 0
  %v1016 = vsel %vm342, %v191, 0
  %v1019 = vsel %vm342, %v192, 0
  %v1022 = vsel %vm342, %v193, 0
  %v1025 = vsel %vm342, %v194, 0
  %v1028 = vsel %vm342, %v195, 0
  %v1031 = vsel %vm342, %v196, 0
  %v1034 = vsel %vm342, %v197, 0
  %v1037 = vsel %vm342, %v198, 0
  %v1040 = vsel %vm342, %v199, 0
  %v1043 = vsel %vm342, %v200, 0
  %v1046 = vsel %vm342, %v201, 0
  %v1049 = vsel %vm342, %v202, 0
  %v1052 = vsel %vm342, %v203, 0
  %v1055 = vsel %vm342, %v204, 0
  %v1058 = vsel %vm342, %v205, 0
  %v1061 = vsel %vm342, %v206, 0
  %v1064 = vsel %vm342, %v207, 0
  %v1067 = vsel %vm342, %v208, 0
  %v1070 = vsel %vm342, %v209, 0
  %v1073 = vsel %vm342, %v210, 0
  %v1076 = vsel %vm342, %v211, 0
  %v1079 = vsel %vm342, %v212, 0
  %v1082 = vsel %vm342, %v213, 0
  %v1085 = vsel %vm342, %v214, 0
  %v1088 = vsel %vm342, %v215, 0
  %v1091 = vsel %vm342, %v216, 0
  %v1094 = vsel %vm342, %v217, 0
  %v1097 = vsel %vm342, %v218, 0
  %v1100 = vsel %vm342, %v219, 0
  %v1103 = vsel %vm342, %v220, 0
  %v1106 = vsel %vm342, %v221, 0
  %v1109 = vsel %vm342, %v222, 0
  %v1112 = vsel %vm342, %v223, 0
  %v1115 = vsel %vm342, %v224, 0
  %v1118 = vsel %vm342, %v225, 0
  %v1121 = vsel %vm342, %v226, 0
  %v1124 = vsel %vm342, %v227, 0
  %v1127 = vsel %vm342, %v228, 0
  %v1130 = vsel %vm342, %v229, 0
  %v1133 = vsel %vm342, %v230, 0
  %v1136 = vsel %vm342, %v231, 0
  %v1139 = vsel %vm342, %v232, 0
  %v1142 = vsel %vm342, %v233, 0
  %v1145 = vsel %vm342, %v234, 0
  %v1148 = vsel %vm342, %v235, 0
  %v1151 = vsel %vm342, %v236, 0
  %v1154 = vsel %vm342, %v237, 0
  %1156 = vmatprep.subr.mxu0 0.0
  %1157 = vmatpush1.msra.mxu0 %v127
  %1158 = vmatprep.subr.mxu0 0.0
  %1159 = vmatpush1.msra.mxu0 %v132
  %1160 = vmatprep.subr.mxu0 0.0
  %1161 = vmatpush1.msra.mxu0 %v137
  %1162 = vmatprep.subr.mxu0 0.0
  %1163 = vmatpush1.msra.mxu0 %v142
  %1164 = vmatprep.subr.mxu0 0.0
  %1165 = vmatpush1.msra.mxu0 %v147
  %1166 = vmatprep.subr.mxu0 0.0
  %1167 = vmatpush1.msra.mxu0 %v152
  %1168 = vmatprep.subr.mxu0 0.0
  %1169 = vmatpush1.msra.mxu0 %v157
  %1170 = vmatprep.subr.mxu0 0.0
  %1171 = vmatpush1.msra.mxu0 %v162
  %1172 = vmatprep.subr.mxu0 0.0
  %1173 = vmatpush1.msra.mxu0 %v167
  %1174 = vmatprep.subr.mxu0 0.0
  %1175 = vmatpush1.msra.mxu0 0.0
  %1176 = vmatprep.subr.mxu0 0.0
  %1177 = vmatpush1.msra.mxu0 0.0
  %1178 = vmatprep.subr.mxu0 0.0
  %1179 = vmatpush1.msra.mxu0 0.0
  %1180 = vmatprep.subr.mxu0 0.0
  %1181 = vmatpush1.msra.mxu0 0.0
  %1182 = vmatprep.subr.mxu0 0.0
  %1183 = vmatpush1.msra.mxu0 0.0
  %1184 = vmatprep.subr.mxu0 0.0
  %1185 = vmatpush1.msra.mxu0 0.0
  %1186 = vmatprep.subr.mxu0 0.0
  %1187 = vmatpush1.msra.mxu0 0.0
  %1188 = vmatprep.subr.mxu0 0.0
  %1189 = vmatpush1.msra.mxu0 0.0
  %1190 = vmatprep.subr.mxu0 0.0
  %1191 = vmatpush1.msra.mxu0 0.0
  %1192 = vmatprep.subr.mxu0 0.0
  %1193 = vmatpush1.msra.mxu0 0.0
  %1194 = vmatprep.subr.mxu0 0.0
  %1195 = vmatpush1.msra.mxu0 0.0
  %1196 = vmatprep.subr.mxu0 0.0
  %1197 = vmatpush1.msra.mxu0 0.0
  %1198 = vmatprep.subr.mxu0 0.0
  %1199 = vmatpush1.msra.mxu0 0.0
  %1200 = vmatprep.subr.mxu0 0.0
  %1201 = vmatpush1.msra.mxu0 0.0
  %1202 = vmatprep.subr.mxu0 0.0
  %1203 = vmatpush1.msra.mxu0 0.0
  %1204 = vmatprep.subr.mxu0 0.0
  %1205 = vmatpush1.msra.mxu0 0.0
  %1206 = vmatprep.subr.mxu0 0.0
  %1207 = vmatpush1.msra.mxu0 0.0
  %1208 = vmatprep.subr.mxu0 0.0
  %1209 = vmatpush1.msra.mxu0 0.0
  %1210 = vmatprep.subr.mxu0 0.0
  %1211 = vmatpush1.msra.mxu0 0.0
  %1212 = vmatprep.subr.mxu0 0.0
  %1213 = vmatpush1.msra.mxu0 0.0
  %1214 = vmatprep.subr.mxu0 0.0
  %1215 = vmatpush1.msra.mxu0 0.0
  %1216 = vmatprep.subr.mxu0 0.0
  %1217 = vmatpush1.msra.mxu0 0.0
  %1218 = vmatprep.subr.mxu0 0.0
  %1219 = vmatpush1.msra.mxu0 0.0
  %1220 = vmatprep.mubr.f32.mxu0 0.0
  %1221 = vmatmul.mubr.f32.gmra.mrb[0].mxu0 %v953
  %v1222 = vpop.f32.mrb[0].mxu0
  %v1223 = vadd.f32 %v614, %v1222
  %v1224 = vpop.f32.mrb[0].mxu0
  %1225 = vmatprep.mubr.f32.mxu0 0.0
  %1226 = vmatmul.mubr.f32.gmra.mrb[0].mxu0 %v956
  %v1227 = vpop.f32.mrb[0].mxu0
  %v1228 = vadd.f32 %v619, %v1227
  %v1229 = vpop.f32.mrb[0].mxu0
  %1230 = vmatprep.mubr.f32.mxu0 0.0
  %1231 = vmatmul.mubr.f32.gmra.mrb[0].mxu0 %v959
  %v1232 = vpop.f32.mrb[0].mxu0
  %v1233 = vadd.f32 %v624, %v1232
  %v1234 = vpop.f32.mrb[0].mxu0
  %1235 = vmatprep.mubr.f32.mxu0 0.0
  %1236 = vmatmul.mubr.f32.gmra.mrb[0].mxu0 %v962
  %v1237 = vpop.f32.mrb[0].mxu0
  %v1238 = vadd.f32 %v629, %v1237
  %v1239 = vpop.f32.mrb[0].mxu0
  %1240 = vmatprep.mubr.f32.mxu0 0.0
  %1241 = vmatmul.mubr.f32.gmra.mrb[0].mxu0 %v965
  %v1242 = vpop.f32.mrb[0].mxu0
  %v1243 = vadd.f32 %v634, %v1242
  %v1244 = vpop.f32.mrb[0].mxu0
  %1245 = vmatprep.mubr.f32.mxu0 0.0
  %1246 = vmatmul.mubr.f32.gmra.mrb[0].mxu0 %v968
  %v1247 = vpop.f32.mrb[0].mxu0
  %v1248 = vadd.f32 %v639, %v1247
  %v1249 = vpop.f32.mrb[0].mxu0
  %1250 = vmatprep.mubr.f32.mxu0 0.0
  %1251 = vmatmul.mubr.f32.gmra.mrb[0].mxu0 %v971
  %v1252 = vpop.f32.mrb[0].mxu0
  %v1253 = vadd.f32 %v644, %v1252
  %v1254 = vpop.f32.mrb[0].mxu0
  %1255 = vmatprep.mubr.f32.mxu0 0.0
  %1256 = vmatmul.mubr.f32.gmra.mrb[0].mxu0 %v974
  %v1257 = vpop.f32.mrb[0].mxu0
  %v1258 = vadd.f32 %v649, %v1257
  %v1259 = vpop.f32.mrb[0].mxu0
  %1260 = vmatprep.mubr.f32.mxu0 0.0
  %1261 = vmatmul.mubr.f32.gmra.mrb[0].mxu0 %v977
  %v1262 = vpop.f32.mrb[0].mxu0
  %v1263 = vadd.f32 %v654, %v1262
  %v1264 = vpop.f32.mrb[0].mxu0
  %1265 = vmatprep.mubr.f32.mxu0 0.0
  %1266 = vmatmul.mubr.f32.gmra.mrb[0].mxu0 %v980
  %v1267 = vpop.f32.mrb[0].mxu0
  %v1268 = vadd.f32 %v659, %v1267
  %v1269 = vpop.f32.mrb[0].mxu0
  %1270 = vmatprep.mubr.f32.mxu0 0.0
  %1271 = vmatmul.mubr.f32.gmra.mrb[0].mxu0 %v983
  %v1272 = vpop.f32.mrb[0].mxu0
  %v1273 = vadd.f32 %v664, %v1272
  %v1274 = vpop.f32.mrb[0].mxu0
  %1275 = vmatprep.mubr.f32.mxu0 0.0
  %1276 = vmatmul.mubr.f32.gmra.mrb[0].mxu0 %v986
  %v1277 = vpop.f32.mrb[0].mxu0
  %v1278 = vadd.f32 %v669, %v1277
  %v1279 = vpop.f32.mrb[0].mxu0
  %1280 = vmatprep.mubr.f32.mxu0 0.0
  %1281 = vmatmul.mubr.f32.gmra.mrb[0].mxu0 %v989
  %v1282 = vpop.f32.mrb[0].mxu0
  %v1283 = vadd.f32 %v674, %v1282
  %v1284 = vpop.f32.mrb[0].mxu0
  %1285 = vmatprep.mubr.f32.mxu0 0.0
  %1286 = vmatmul.mubr.f32.gmra.mrb[0].mxu0 %v992
  %v1287 = vpop.f32.mrb[0].mxu0
  %v1288 = vadd.f32 %v679, %v1287
  %v1289 = vpop.f32.mrb[0].mxu0
  %1290 = vmatprep.mubr.f32.mxu0 0.0
  %1291 = vmatmul.mubr.f32.gmra.mrb[0].mxu0 %v995
  %v1292 = vpop.f32.mrb[0].mxu0
  %v1293 = vadd.f32 %v684, %v1292
  %v1294 = vpop.f32.mrb[0].mxu0
  %1295 = vmatprep.mubr.f32.mxu0 0.0
  %1296 = vmatmul.mubr.f32.gmra.mrb[0].mxu0 %v998
  %v1297 = vpop.f32.mrb[0].mxu0
  %v1298 = vadd.f32 %v689, %v1297
  %v1299 = vpop.f32.mrb[0].mxu0
  %1300 = vmatprep.mubr.f32.mxu0 0.0
  %1301 = vmatmul.mubr.f32.gmra.mrb[0].mxu0 %v1001
  %v1302 = vpop.f32.mrb[0].mxu0
  %v1303 = vadd.f32 %v694, %v1302
  %v1304 = vpop.f32.mrb[0].mxu0
  %1305 = vmatprep.mubr.f32.mxu0 0.0
  %1306 = vmatmul.mubr.f32.gmra.mrb[0].mxu0 %v1004
  %v1307 = vpop.f32.mrb[0].mxu0
  %v1308 = vadd.f32 %v699, %v1307
  %v1309 = vpop.f32.mrb[0].mxu0
  %1310 = vmatprep.mubr.f32.mxu0 0.0
  %1311 = vmatmul.mubr.f32.gmra.mrb[0].mxu0 %v1007
  %v1312 = vpop.f32.mrb[0].mxu0
  %v1313 = vadd.f32 %v704, %v1312
  %v1314 = vpop.f32.mrb[0].mxu0
  %1315 = vmatprep.mubr.f32.mxu0 0.0
  %1316 = vmatmul.mubr.f32.gmra.mrb[0].mxu0 %v1010
  %v1317 = vpop.f32.mrb[0].mxu0
  %v1318 = vadd.f32 %v709, %v1317
  %v1319 = vpop.f32.mrb[0].mxu0
  %1320 = vmatprep.mubr.f32.mxu0 0.0
  %1321 = vmatmul.mubr.f32.gmra.mrb[0].mxu0 %v1013
  %v1322 = vpop.f32.mrb[0].mxu0
  %v1323 = vadd.f32 %v714, %v1322
  %v1324 = vpop.f32.mrb[0].mxu0
  %1325 = vmatprep.mubr.f32.mxu0 0.0
  %1326 = vmatmul.mubr.f32.gmra.mrb[0].mxu0 %v1016
  %v1327 = vpop.f32.mrb[0].mxu0
  %v1328 = vadd.f32 %v719, %v1327
  %v1329 = vpop.f32.mrb[0].mxu0
  %1330 = vmatprep.mubr.f32.mxu0 0.0
  %1331 = vmatmul.mubr.f32.gmra.mrb[0].mxu0 %v1019
  %v1332 = vpop.f32.mrb[0].mxu0
  %v1333 = vadd.f32 %v724, %v1332
  %v1334 = vpop.f32.mrb[0].mxu0
  %1335 = vmatprep.mubr.f32.mxu0 0.0
  %1336 = vmatmul.mubr.f32.gmra.mrb[0].mxu0 %v1022
  %v1337 = vpop.f32.mrb[0].mxu0
  %v1338 = vadd.f32 %v729, %v1337
  %v1339 = vpop.f32.mrb[0].mxu0
  %1340 = vmatprep.mubr.f32.mxu0 0.0
  %1341 = vmatmul.mubr.f32.gmra.mrb[0].mxu0 %v1025
  %v1342 = vpop.f32.mrb[0].mxu0
  %v1343 = vadd.f32 %v734, %v1342
  %v1344 = vpop.f32.mrb[0].mxu0
  %1345 = vmatprep.mubr.f32.mxu0 0.0
  %1346 = vmatmul.mubr.f32.gmra.mrb[0].mxu0 %v1028
  %v1347 = vpop.f32.mrb[0].mxu0
  %v1348 = vadd.f32 %v739, %v1347
  %v1349 = vpop.f32.mrb[0].mxu0
  %1350 = vmatprep.mubr.f32.mxu0 0.0
  %1351 = vmatmul.mubr.f32.gmra.mrb[0].mxu0 %v1031
  %v1352 = vpop.f32.mrb[0].mxu0
  %v1353 = vadd.f32 %v744, %v1352
  %v1354 = vpop.f32.mrb[0].mxu0
  %1355 = vmatprep.mubr.f32.mxu0 0.0
  %1356 = vmatmul.mubr.f32.gmra.mrb[0].mxu0 %v1034
  %v1357 = vpop.f32.mrb[0].mxu0
  %v1358 = vadd.f32 %v749, %v1357
  %v1359 = vpop.f32.mrb[0].mxu0
  %1360 = vmatprep.mubr.f32.mxu0 0.0
  %1361 = vmatmul.mubr.f32.gmra.mrb[0].mxu0 %v1037
  %v1362 = vpop.f32.mrb[0].mxu0
  %v1363 = vadd.f32 %v754, %v1362
  %v1364 = vpop.f32.mrb[0].mxu0
  %1365 = vmatprep.mubr.f32.mxu0 0.0
  %1366 = vmatmul.mubr.f32.gmra.mrb[0].mxu0 %v1040
  %v1367 = vpop.f32.mrb[0].mxu0
  %v1368 = vadd.f32 %v759, %v1367
  %v1369 = vpop.f32.mrb[0].mxu0
  %1370 = vmatprep.mubr.f32.mxu0 0.0
  %1371 = vmatmul.mubr.f32.gmra.mrb[0].mxu0 %v1043
  %v1372 = vpop.f32.mrb[0].mxu0
  %v1373 = vadd.f32 %v764, %v1372
  %v1374 = vpop.f32.mrb[0].mxu0
  %1375 = vmatprep.mubr.f32.mxu0 0.0
  %1376 = vmatmul.mubr.f32.gmra.mrb[0].mxu0 %v1046
  %v1377 = vpop.f32.mrb[0].mxu0
  %v1378 = vadd.f32 %v769, %v1377
  %v1379 = vpop.f32.mrb[0].mxu0
  %1380 = vmatprep.mubr.f32.mxu0 0.0
  %1381 = vmatmul.mubr.f32.gmra.mrb[0].mxu0 %v1049
  %v1382 = vpop.f32.mrb[0].mxu0
  %v1383 = vadd.f32 %v774, %v1382
  %v1384 = vpop.f32.mrb[0].mxu0
  %1385 = vmatprep.mubr.f32.mxu0 0.0
  %1386 = vmatmul.mubr.f32.gmra.mrb[0].mxu0 %v1052
  %v1387 = vpop.f32.mrb[0].mxu0
  %v1388 = vadd.f32 %v779, %v1387
  %v1389 = vpop.f32.mrb[0].mxu0
  %1390 = vmatprep.mubr.f32.mxu0 0.0
  %1391 = vmatmul.mubr.f32.gmra.mrb[0].mxu0 %v1055
  %v1392 = vpop.f32.mrb[0].mxu0
  %v1393 = vadd.f32 %v784, %v1392
  %v1394 = vpop.f32.mrb[0].mxu0
  %1395 = vmatprep.mubr.f32.mxu0 0.0
  %1396 = vmatmul.mubr.f32.gmra.mrb[0].mxu0 %v1058
  %v1397 = vpop.f32.mrb[0].mxu0
  %v1398 = vadd.f32 %v789, %v1397
  %v1399 = vpop.f32.mrb[0].mxu0
  %1400 = vmatprep.mubr.f32.mxu0 0.0
  %1401 = vmatmul.mubr.f32.gmra.mrb[0].mxu0 %v1061
  %v1402 = vpop.f32.mrb[0].mxu0
  %v1403 = vadd.f32 %v794, %v1402
  %v1404 = vpop.f32.mrb[0].mxu0
  %1405 = vmatprep.mubr.f32.mxu0 0.0
  %1406 = vmatmul.mubr.f32.gmra.mrb[0].mxu0 %v1064
  %v1407 = vpop.f32.mrb[0].mxu0
  %v1408 = vadd.f32 %v799, %v1407
  %v1409 = vpop.f32.mrb[0].mxu0
  %1410 = vmatprep.mubr.f32.mxu0 0.0
  %1411 = vmatmul.mubr.f32.gmra.mrb[0].mxu0 %v1067
  %v1412 = vpop.f32.mrb[0].mxu0
  %v1413 = vadd.f32 %v804, %v1412
  %v1414 = vpop.f32.mrb[0].mxu0
  %1415 = vmatprep.mubr.f32.mxu0 0.0
  %1416 = vmatmul.mubr.f32.gmra.mrb[0].mxu0 %v1070
  %v1417 = vpop.f32.mrb[0].mxu0
  %v1418 = vadd.f32 %v809, %v1417
  %v1419 = vpop.f32.mrb[0].mxu0
  %1420 = vmatprep.mubr.f32.mxu0 0.0
  %1421 = vmatmul.mubr.f32.gmra.mrb[0].mxu0 %v1073
  %v1422 = vpop.f32.mrb[0].mxu0
  %v1423 = vadd.f32 %v814, %v1422
  %v1424 = vpop.f32.mrb[0].mxu0
  %1425 = vmatprep.mubr.f32.mxu0 0.0
  %1426 = vmatmul.mubr.f32.gmra.mrb[0].mxu0 %v1076
  %v1427 = vpop.f32.mrb[0].mxu0
  %v1428 = vadd.f32 %v819, %v1427
  %v1429 = vpop.f32.mrb[0].mxu0
  %1430 = vmatprep.mubr.f32.mxu0 0.0
  %1431 = vmatmul.mubr.f32.gmra.mrb[0].mxu0 %v1079
  %v1432 = vpop.f32.mrb[0].mxu0
  %v1433 = vadd.f32 %v824, %v1432
  %v1434 = vpop.f32.mrb[0].mxu0
  %1435 = vmatprep.mubr.f32.mxu0 0.0
  %1436 = vmatmul.mubr.f32.gmra.mrb[0].mxu0 %v1082
  %v1437 = vpop.f32.mrb[0].mxu0
  %v1438 = vadd.f32 %v829, %v1437
  %v1439 = vpop.f32.mrb[0].mxu0
  %1440 = vmatprep.mubr.f32.mxu0 0.0
  %1441 = vmatmul.mubr.f32.gmra.mrb[0].mxu0 %v1085
  %v1442 = vpop.f32.mrb[0].mxu0
  %v1443 = vadd.f32 %v834, %v1442
  %v1444 = vpop.f32.mrb[0].mxu0
  %1445 = vmatprep.mubr.f32.mxu0 0.0
  %1446 = vmatmul.mubr.f32.gmra.mrb[0].mxu0 %v1088
  %v1447 = vpop.f32.mrb[0].mxu0
  %v1448 = vadd.f32 %v839, %v1447
  %v1449 = vpop.f32.mrb[0].mxu0
  %1450 = vmatprep.mubr.f32.mxu0 0.0
  %1451 = vmatmul.mubr.f32.gmra.mrb[0].mxu0 %v1091
  %v1452 = vpop.f32.mrb[0].mxu0
  %v1453 = vadd.f32 %v844, %v1452
  %v1454 = vpop.f32.mrb[0].mxu0
  %1455 = vmatprep.mubr.f32.mxu0 0.0
  %1456 = vmatmul.mubr.f32.gmra.mrb[0].mxu0 %v1094
  %v1457 = vpop.f32.mrb[0].mxu0
  %v1458 = vadd.f32 %v849, %v1457
  %v1459 = vpop.f32.mrb[0].mxu0
  %1460 = vmatprep.mubr.f32.mxu0 0.0
  %1461 = vmatmul.mubr.f32.gmra.mrb[0].mxu0 %v1097
  %v1462 = vpop.f32.mrb[0].mxu0
  %v1463 = vadd.f32 %v854, %v1462
  %v1464 = vpop.f32.mrb[0].mxu0
  %1465 = vmatprep.mubr.f32.mxu0 0.0
  %1466 = vmatmul.mubr.f32.gmra.mrb[0].mxu0 %v1100
  %v1467 = vpop.f32.mrb[0].mxu0
  %v1468 = vadd.f32 %v859, %v1467
  %v1469 = vpop.f32.mrb[0].mxu0
  %1470 = vmatprep.mubr.f32.mxu0 0.0
  %1471 = vmatmul.mubr.f32.gmra.mrb[0].mxu0 %v1103
  %v1472 = vpop.f32.mrb[0].mxu0
  %v1473 = vadd.f32 %v864, %v1472
  %v1474 = vpop.f32.mrb[0].mxu0
  %1475 = vmatprep.mubr.f32.mxu0 0.0
  %1476 = vmatmul.mubr.f32.gmra.mrb[0].mxu0 %v1106
  %v1477 = vpop.f32.mrb[0].mxu0
  %v1478 = vadd.f32 %v869, %v1477
  %v1479 = vpop.f32.mrb[0].mxu0
  %1480 = vmatprep.mubr.f32.mxu0 0.0
  %1481 = vmatmul.mubr.f32.gmra.mrb[0].mxu0 %v1109
  %v1482 = vpop.f32.mrb[0].mxu0
  %v1483 = vadd.f32 %v874, %v1482
  %v1484 = vpop.f32.mrb[0].mxu0
  %1485 = vmatprep.mubr.f32.mxu0 0.0
  %1486 = vmatmul.mubr.f32.gmra.mrb[0].mxu0 %v1112
  %v1487 = vpop.f32.mrb[0].mxu0
  %v1488 = vadd.f32 %v879, %v1487
  %v1489 = vpop.f32.mrb[0].mxu0
  %1490 = vmatprep.mubr.f32.mxu0 0.0
  %1491 = vmatmul.mubr.f32.gmra.mrb[0].mxu0 %v1115
  %v1492 = vpop.f32.mrb[0].mxu0
  %v1493 = vadd.f32 %v884, %v1492
  %v1494 = vpop.f32.mrb[0].mxu0
  %1495 = vmatprep.mubr.f32.mxu0 0.0
  %1496 = vmatmul.mubr.f32.gmra.mrb[0].mxu0 %v1118
  %v1497 = vpop.f32.mrb[0].mxu0
  %v1498 = vadd.f32 %v889, %v1497
  %v1499 = vpop.f32.mrb[0].mxu0
  %1500 = vmatprep.mubr.f32.mxu0 0.0
  %1501 = vmatmul.mubr.f32.gmra.mrb[0].mxu0 %v1121
  %v1502 = vpop.f32.mrb[0].mxu0
  %v1503 = vadd.f32 %v894, %v1502
  %v1504 = vpop.f32.mrb[0].mxu0
  %1505 = vmatprep.mubr.f32.mxu0 0.0
  %1506 = vmatmul.mubr.f32.gmra.mrb[0].mxu0 %v1124
  %v1507 = vpop.f32.mrb[0].mxu0
  %v1508 = vadd.f32 %v899, %v1507
  %v1509 = vpop.f32.mrb[0].mxu0
  %1510 = vmatprep.mubr.f32.mxu0 0.0
  %1511 = vmatmul.mubr.f32.gmra.mrb[0].mxu0 %v1127
  %v1512 = vpop.f32.mrb[0].mxu0
  %v1513 = vadd.f32 %v904, %v1512
  %v1514 = vpop.f32.mrb[0].mxu0
  %1515 = vmatprep.mubr.f32.mxu0 0.0
  %1516 = vmatmul.mubr.f32.gmra.mrb[0].mxu0 %v1130
  %v1517 = vpop.f32.mrb[0].mxu0
  %v1518 = vadd.f32 %v909, %v1517
  %v1519 = vpop.f32.mrb[0].mxu0
  %1520 = vmatprep.mubr.f32.mxu0 0.0
  %1521 = vmatmul.mubr.f32.gmra.mrb[0].mxu0 %v1133
  %v1522 = vpop.f32.mrb[0].mxu0
  %v1523 = vadd.f32 %v914, %v1522
  %v1524 = vpop.f32.mrb[0].mxu0
  %1525 = vmatprep.mubr.f32.mxu0 0.0
  %1526 = vmatmul.mubr.f32.gmra.mrb[0].mxu0 %v1136
  %v1527 = vpop.f32.mrb[0].mxu0
  %v1528 = vadd.f32 %v919, %v1527
  %v1529 = vpop.f32.mrb[0].mxu0
  %1530 = vmatprep.mubr.f32.mxu0 0.0
  %1531 = vmatmul.mubr.f32.gmra.mrb[0].mxu0 %v1139
  %v1532 = vpop.f32.mrb[0].mxu0
  %v1533 = vadd.f32 %v924, %v1532
  %v1534 = vpop.f32.mrb[0].mxu0
  %1535 = vmatprep.mubr.f32.mxu0 0.0
  %1536 = vmatmul.mubr.f32.gmra.mrb[0].mxu0 %v1142
  %v1537 = vpop.f32.mrb[0].mxu0
  %v1538 = vadd.f32 %v929, %v1537
  %v1539 = vpop.f32.mrb[0].mxu0
  %1540 = vmatprep.mubr.f32.mxu0 0.0
  %1541 = vmatmul.mubr.f32.gmra.mrb[0].mxu0 %v1145
  %v1542 = vpop.f32.mrb[0].mxu0
  %v1543 = vadd.f32 %v934, %v1542
  %v1544 = vpop.f32.mrb[0].mxu0
  %1545 = vmatprep.mubr.f32.mxu0 0.0
  %1546 = vmatmul.mubr.f32.gmra.mrb[0].mxu0 %v1148
  %v1547 = vpop.f32.mrb[0].mxu0
  %v1548 = vadd.f32 %v939, %v1547
  %v1549 = vpop.f32.mrb[0].mxu0
  %1550 = vmatprep.mubr.f32.mxu0 0.0
  %1551 = vmatmul.mubr.f32.gmra.mrb[0].mxu0 %v1151
  %v1552 = vpop.f32.mrb[0].mxu0
  %v1553 = vadd.f32 %v944, %v1552
  %v1554 = vpop.f32.mrb[0].mxu0
  %1555 = vmatprep.mubr.f32.mxu0 0.0
  %1556 = vmatmul.mubr.f32.gmra.mrb[0].mxu0 %v1154
  %v1557 = vpop.f32.mrb[0].mxu0
  %v1558 = vadd.f32 %v949, %v1557
  %v1559 = vpop.f32.mrb[0].mxu0
  %1560 = vdwg.mxu0
  %v1561 = vld [vmem:[%s4] sm:$0xff]
  %v1562 = vld [vmem:[%s4 + $0x8] sm:$0xff]
  %v1563 = vld [vmem:[%s4 + $0x10] sm:$0xff]
  %v1564 = vld [vmem:[%s4 + $0x18] sm:$0xff]
  %v1565 = vld [vmem:[%s4 + $0x20] sm:$0xff]
  %v1566 = vld [vmem:[%s4 + $0x28] sm:$0xff]
  %v1567 = vld [vmem:[%s4 + $0x30] sm:$0xff]
  %v1568 = vld [vmem:[%s4 + $0x38] sm:$0xff]
  %v1569 = vld [vmem:[%s4 + $0x40] sm:$0xff]
  %v1570 = vld [vmem:[%s4 + $0x48] sm:$0xff]
  %v1571 = vld [vmem:[%s4 + $0x50] sm:$0xff]
  %v1572 = vld [vmem:[%s4 + $0x58] sm:$0xff]
  %v1573 = vld [vmem:[%s4 + $0x60] sm:$0xff]
  %v1574 = vld [vmem:[%s4 + $0x68] sm:$0xff]
  %v1575 = vld [vmem:[%s4 + $0x70] sm:$0xff]
  %v1576 = vld [vmem:[%s4 + $0x78] sm:$0xff]
  %v1577 = vld [vmem:[%s4 + $0x80] sm:$0xff]
  %v1578 = vld [vmem:[%s4 + $0x88] sm:$0xff]
  %v1579 = vld [vmem:[%s4 + $0x90] sm:$0xff]
  %v1580 = vld [vmem:[%s4 + $0x98] sm:$0xff]
  %v1581 = vld [vmem:[%s4 + $0xa0] sm:$0xff]
  %v1582 = vld [vmem:[%s4 + $0xa8] sm:$0xff]
  %v1583 = vld [vmem:[%s4 + $0xb0] sm:$0xff]
  %v1584 = vld [vmem:[%s4 + $0xb8] sm:$0xff]
  %v1585 = vld [vmem:[%s4 + $0xc0] sm:$0xff]
  %v1586 = vld [vmem:[%s4 + $0xc8] sm:$0xff]
  %v1587 = vld [vmem:[%s4 + $0xd0] sm:$0xff]
  %v1588 = vld [vmem:[%s4 + $0xd8] sm:$0xff]
  %v1589 = vld [vmem:[%s4 + $0xe0] sm:$0xff]
  %v1590 = vld [vmem:[%s4 + $0xe8] sm:$0xff]
  %v1591 = vld [vmem:[%s4 + $0xf0] sm:$0xff]
  %v1592 = vld [vmem:[%s4 + $0xf8] sm:$0xff]
  %v1593 = vld [vmem:[%s4 + $0x100] sm:$0xff]
  %v1594 = vld [vmem:[%s4 + $0x108] sm:$0xff]
  %v1595 = vld [vmem:[%s4 + $0x110] sm:$0xff]
  %v1596 = vld [vmem:[%s4 + $0x118] sm:$0xff]
  %v1597 = vld [vmem:[%s4 + $0x120] sm:$0xff]
  %v1598 = vld [vmem:[%s4 + $0x128] sm:$0xff]
  %v1599 = vld [vmem:[%s4 + $0x130] sm:$0xff]
  %v1600 = vld [vmem:[%s4 + $0x138] sm:$0xff]
  %v1601 = vld [vmem:[%s4 + $0x140] sm:$0xff]
  %v1602 = vld [vmem:[%s4 + $0x148] sm:$0xff]
  %v1603 = vld [vmem:[%s4 + $0x150] sm:$0xff]
  %v1604 = vld [vmem:[%s4 + $0x158] sm:$0xff]
  %v1605 = vld [vmem:[%s4 + $0x160] sm:$0xff]
  %v1606 = vld [vmem:[%s4 + $0x168] sm:$0xff]
  %v1607 = vld [vmem:[%s4 + $0x170] sm:$0xff]
  %v1608 = vld [vmem:[%s4 + $0x178] sm:$0xff]
  %v1609 = vld [vmem:[%s4 + $0x180] sm:$0xff]
  %v1610 = vld [vmem:[%s4 + $0x188] sm:$0xff]
  %v1611 = vld [vmem:[%s4 + $0x190] sm:$0xff]
  %v1612 = vld [vmem:[%s4 + $0x198] sm:$0xff]
  %v1613 = vld [vmem:[%s4 + $0x1a0] sm:$0xff]
  %v1614 = vld [vmem:[%s4 + $0x1a8] sm:$0xff]
  %v1615 = vld [vmem:[%s4 + $0x1b0] sm:$0xff]
  %v1616 = vld [vmem:[%s4 + $0x1b8] sm:$0xff]
  %v1617 = vld [vmem:[%s4 + $0x1c0] sm:$0xff]
  %v1618 = vld [vmem:[%s4 + $0x1c8] sm:$0xff]
  %v1619 = vld [vmem:[%s4 + $0x1d0] sm:$0xff]
  %v1620 = vld [vmem:[%s4 + $0x1d8] sm:$0xff]
  %v1621 = vld [vmem:[%s4 + $0x1e0] sm:$0xff]
  %v1622 = vld [vmem:[%s4 + $0x1e8] sm:$0xff]
  %v1623 = vld [vmem:[%s4 + $0x1f0] sm:$0xff]
  %v1624 = vld [vmem:[%s4 + $0x1f8] sm:$0xff]
  %v1625 = vld [vmem:[%s4 + $0x200] sm:$0xff]
  %v1626 = vld [vmem:[%s4 + $0x208] sm:$0xff]
  %v1627 = vld [vmem:[%s4 + $0x210] sm:$0xff]
  %v1628 = vld [vmem:[%s4 + $0x218] sm:$0xff]
  %v1629 = vadd.f32 %v1223, %v1561
  %v1630 = vadd.f32 %v1228, %v1562
  %v1631 = vadd.f32 %v1233, %v1563
  %v1632 = vadd.f32 %v1238, %v1564
  %v1633 = vadd.f32 %v1243, %v1565
  %v1634 = vadd.f32 %v1248, %v1566
  %v1635 = vadd.f32 %v1253, %v1567
  %v1636 = vadd.f32 %v1258, %v1568
  %v1637 = vadd.f32 %v1263, %v1569
  %v1638 = vadd.f32 %v1268, %v1570
  %v1639 = vadd.f32 %v1273, %v1571
  %v1640 = vadd.f32 %v1278, %v1572
  %v1641 = vadd.f32 %v1283, %v1573
  %v1642 = vadd.f32 %v1288, %v1574
  %v1643 = vadd.f32 %v1293, %v1575
  %v1644 = vadd.f32 %v1298, %v1576
  %v1645 = vadd.f32 %v1303, %v1577
  %v1646 = vadd.f32 %v1308, %v1578
  %v1647 = vadd.f32 %v1313, %v1579
  %v1648 = vadd.f32 %v1318, %v1580
  %v1649 = vadd.f32 %v1323, %v1581
  %v1650 = vadd.f32 %v1328, %v1582
  %v1651 = vadd.f32 %v1333, %v1583
  %v1652 = vadd.f32 %v1338, %v1584
  %v1653 = vadd.f32 %v1343, %v1585
  %v1654 = vadd.f32 %v1348, %v1586
  %v1655 = vadd.f32 %v1353, %v1587
  %v1656 = vadd.f32 %v1358, %v1588
  %v1657 = vadd.f32 %v1363, %v1589
  %v1658 = vadd.f32 %v1368, %v1590
  %v1659 = vadd.f32 %v1373, %v1591
  %v1660 = vadd.f32 %v1378, %v1592
  %v1661 = vadd.f32 %v1383, %v1593
  %v1662 = vadd.f32 %v1388, %v1594
  %v1663 = vadd.f32 %v1393, %v1595
  %v1664 = vadd.f32 %v1398, %v1596
  %v1665 = vadd.f32 %v1403, %v1597
  %v1666 = vadd.f32 %v1408, %v1598
  %v1667 = vadd.f32 %v1413, %v1599
  %v1668 = vadd.f32 %v1418, %v1600
  %v1669 = vadd.f32 %v1423, %v1601
  %v1670 = vadd.f32 %v1428, %v1602
  %v1671 = vadd.f32 %v1433, %v1603
  %v1672 = vadd.f32 %v1438, %v1604
  %v1673 = vadd.f32 %v1443, %v1605
  %v1674 = vadd.f32 %v1448, %v1606
  %v1675 = vadd.f32 %v1453, %v1607
  %v1676 = vadd.f32 %v1458, %v1608
  %v1677 = vadd.f32 %v1463, %v1609
  %v1678 = vadd.f32 %v1468, %v1610
  %v1679 = vadd.f32 %v1473, %v1611
  %v1680 = vadd.f32 %v1478, %v1612
  %v1681 = vadd.f32 %v1483, %v1613
  %v1682 = vadd.f32 %v1488, %v1614
  %v1683 = vadd.f32 %v1493, %v1615
  %v1684 = vadd.f32 %v1498, %v1616
  %v1685 = vadd.f32 %v1503, %v1617
  %v1686 = vadd.f32 %v1508, %v1618
  %v1687 = vadd.f32 %v1513, %v1619
  %v1688 = vadd.f32 %v1518, %v1620
  %v1689 = vadd.f32 %v1523, %v1621
  %v1690 = vadd.f32 %v1528, %v1622
  %v1691 = vadd.f32 %v1533, %v1623
  %v1692 = vadd.f32 %v1538, %v1624
  %v1693 = vadd.f32 %v1543, %v1625
  %v1694 = vadd.f32 %v1548, %v1626
  %v1695 = vadd.f32 %v1553, %v1627
  %v1696 = vadd.f32 %v1558, %v1628
  %vm1697 = vcmask 138240
  %1698 = vst.msk [vmem:[%s5] sm:$0xff] %vm1697, %v1629
  %1699 = vst.msk [vmem:[%s5 + $0x8] sm:$0xff] %vm1697, %v1630
  %1700 = vst.msk [vmem:[%s5 + $0x10] sm:$0xff] %vm1697, %v1631
  %1701 = vst.msk [vmem:[%s5 + $0x18] sm:$0xff] %vm1697, %v1632
  %1702 = vst.msk [vmem:[%s5 + $0x20] sm:$0xff] %vm1697, %v1633
  %1703 = vst.msk [vmem:[%s5 + $0x28] sm:$0xff] %vm1697, %v1634
  %1704 = vst.msk [vmem:[%s5 + $0x30] sm:$0xff] %vm1697, %v1635
  %1705 = vst.msk [vmem:[%s5 + $0x38] sm:$0xff] %vm1697, %v1636
  %1706 = vst.msk [vmem:[%s5 + $0x40] sm:$0xff] %vm1697, %v1637
  %1707 = vst.msk [vmem:[%s5 + $0x48] sm:$0xff] %vm1697, %v1638
  %1708 = vst.msk [vmem:[%s5 + $0x50] sm:$0xff] %vm1697, %v1639
  %1709 = vst.msk [vmem:[%s5 + $0x58] sm:$0xff] %vm1697, %v1640
  %1710 = vst.msk [vmem:[%s5 + $0x60] sm:$0xff] %vm1697, %v1641
  %1711 = vst.msk [vmem:[%s5 + $0x68] sm:$0xff] %vm1697, %v1642
  %1712 = vst.msk [vmem:[%s5 + $0x70] sm:$0xff] %vm1697, %v1643
  %1713 = vst.msk [vmem:[%s5 + $0x78] sm:$0xff] %vm1697, %v1644
  %1714 = vst.msk [vmem:[%s5 + $0x80] sm:$0xff] %vm1697, %v1645
  %1715 = vst.msk [vmem:[%s5 + $0x88] sm:$0xff] %vm1697, %v1646
  %1716 = vst.msk [vmem:[%s5 + $0x90] sm:$0xff] %vm1697, %v1647
  %1717 = vst.msk [vmem:[%s5 + $0x98] sm:$0xff] %vm1697, %v1648
  %1718 = vst.msk [vmem:[%s5 + $0xa0] sm:$0xff] %vm1697, %v1649
  %1719 = vst.msk [vmem:[%s5 + $0xa8] sm:$0xff] %vm1697, %v1650
  %1720 = vst.msk [vmem:[%s5 + $0xb0] sm:$0xff] %vm1697, %v1651
  %1721 = vst.msk [vmem:[%s5 + $0xb8] sm:$0xff] %vm1697, %v1652
  %1722 = vst.msk [vmem:[%s5 + $0xc0] sm:$0xff] %vm1697, %v1653
  %1723 = vst.msk [vmem:[%s5 + $0xc8] sm:$0xff] %vm1697, %v1654
  %1724 = vst.msk [vmem:[%s5 + $0xd0] sm:$0xff] %vm1697, %v1655
  %1725 = vst.msk [vmem:[%s5 + $0xd8] sm:$0xff] %vm1697, %v1656
  %1726 = vst.msk [vmem:[%s5 + $0xe0] sm:$0xff] %vm1697, %v1657
  %1727 = vst.msk [vmem:[%s5 + $0xe8] sm:$0xff] %vm1697, %v1658
  %1728 = vst.msk [vmem:[%s5 + $0xf0] sm:$0xff] %vm1697, %v1659
  %1729 = vst.msk [vmem:[%s5 + $0xf8] sm:$0xff] %vm1697, %v1660
  %1730 = vst.msk [vmem:[%s5 + $0x100] sm:$0xff] %vm1697, %v1661
  %1731 = vst.msk [vmem:[%s5 + $0x108] sm:$0xff] %vm1697, %v1662
  %1732 = vst.msk [vmem:[%s5 + $0x110] sm:$0xff] %vm1697, %v1663
  %1733 = vst.msk [vmem:[%s5 + $0x118] sm:$0xff] %vm1697, %v1664
  %1734 = vst.msk [vmem:[%s5 + $0x120] sm:$0xff] %vm1697, %v1665
  %1735 = vst.msk [vmem:[%s5 + $0x128] sm:$0xff] %vm1697, %v1666
  %1736 = vst.msk [vmem:[%s5 + $0x130] sm:$0xff] %vm1697, %v1667
  %1737 = vst.msk [vmem:[%s5 + $0x138] sm:$0xff] %vm1697, %v1668
  %1738 = vst.msk [vmem:[%s5 + $0x140] sm:$0xff] %vm1697, %v1669
  %1739 = vst.msk [vmem:[%s5 + $0x148] sm:$0xff] %vm1697, %v1670
  %1740 = vst.msk [vmem:[%s5 + $0x150] sm:$0xff] %vm1697, %v1671
  %1741 = vst.msk [vmem:[%s5 + $0x158] sm:$0xff] %vm1697, %v1672
  %1742 = vst.msk [vmem:[%s5 + $0x160] sm:$0xff] %vm1697, %v1673
  %1743 = vst.msk [vmem:[%s5 + $0x168] sm:$0xff] %vm1697, %v1674
  %1744 = vst.msk [vmem:[%s5 + $0x170] sm:$0xff] %vm1697, %v1675
  %1745 = vst.msk [vmem:[%s5 + $0x178] sm:$0xff] %vm1697, %v1676
  %1746 = vst.msk [vmem:[%s5 + $0x180] sm:$0xff] %vm1697, %v1677
  %1747 = vst.msk [vmem:[%s5 + $0x188] sm:$0xff] %vm1697, %v1678
  %1748 = vst.msk [vmem:[%s5 + $0x190] sm:$0xff] %vm1697, %v1679
  %1749 = vst.msk [vmem:[%s5 + $0x198] sm:$0xff] %vm1697, %v1680
  %1750 = vst.msk [vmem:[%s5 + $0x1a0] sm:$0xff] %vm1697, %v1681
  %1751 = vst.msk [vmem:[%s5 + $0x1a8] sm:$0xff] %vm1697, %v1682
  %1752 = vst.msk [vmem:[%s5 + $0x1b0] sm:$0xff] %vm1697, %v1683
  %1753 = vst.msk [vmem:[%s5 + $0x1b8] sm:$0xff] %vm1697, %v1684
  %1754 = vst.msk [vmem:[%s5 + $0x1c0] sm:$0xff] %vm1697, %v1685
  %1755 = vst.msk [vmem:[%s5 + $0x1c8] sm:$0xff] %vm1697, %v1686
  %1756 = vst.msk [vmem:[%s5 + $0x1d0] sm:$0xff] %vm1697, %v1687
  %1757 = vst.msk [vmem:[%s5 + $0x1d8] sm:$0xff] %vm1697, %v1688
  %1758 = vst.msk [vmem:[%s5 + $0x1e0] sm:$0xff] %vm1697, %v1689
  %1759 = vst.msk [vmem:[%s5 + $0x1e8] sm:$0xff] %vm1697, %v1690
  %1760 = vst.msk [vmem:[%s5 + $0x1f0] sm:$0xff] %vm1697, %v1691
  %1761 = vst.msk [vmem:[%s5 + $0x1f8] sm:$0xff] %vm1697, %v1692
  %1762 = vst.msk [vmem:[%s5 + $0x200] sm:$0xff] %vm1697, %v1693
  %1763 = vst.msk [vmem:[%s5 + $0x208] sm:$0xff] %vm1697, %v1694
  %1764 = vst.msk [vmem:[%s5 + $0x210] sm:$0xff] %vm1697, %v1695
  %1765 = vst.msk [vmem:[%s5 + $0x218] sm:$0xff] %vm1697, %v1696
  // Predicated region
  $region22: #{model_forward.1} parent=0 // pred_check
    _
  $region23: #{model_forward.1} parent=0 // pred_check_branch
    %1767 = sbr.rel (0) target = $region25
  $region24: #{model_forward.1} parent=0 // pred_region
    _
  $region25: #{model_forward.1} parent=0 // pred_fallthru
    _
  // Predicated region
  $region26: #{model_forward.1} parent=0 // pred_check
    _
  $region27: #{model_forward.1} parent=0 // pred_check_branch
    %1769 = sbr.rel (0) target = $region29
  $region28: #{model_forward.1} parent=0 // pred_region
    _
  $region29: #{model_forward.1} parent=0 // pred_fallthru
    _

</llo_original>
